<compile_context>
chip_gen: v7x
topology: tpu7x:2x2x1
jax: 0.10.0
libtpu: 0.0.40
codegen_flags: <defaults>
</compile_context>

<pallas_src>
import jax
import jax.numpy as jnp
from jax import lax
from jax.experimental import pallas as pl
from jax.experimental.pallas import tpu as pltpu


HIDDEN_DIM = 32
NUM_LAYERS = 2
INPUT_DIM = 1
OUTPUT_DIM = 1


def _lstm_kernel(x_ref,      # (B*T, D_in)  row-major flattening of (B, T, D_in)
                 wih0_ref,   # (D_in, 4H)
                 whh0_ref,   # (H, 4H)
                 b0_ref,     # (1, 4H)      b_ih0 + b_hh0
                 w1_ref,     # (2H, 4H)     [W_ih1^T ; W_hh1^T]
                 b1_ref,     # (1, 4H)      b_ih1 + b_hh1
                 wfc_ref,    # (H, O)
                 bfc_ref,    # (1, O)
                 out_ref):   # (B, O)
    B = out_ref.shape[0]
    H = whh0_ref.shape[0]
    T = x_ref.shape[0] // B
    D_in = x_ref.shape[1]

    # ---- Hoisted layer-0 input projection: one pass over ALL timesteps. ----
    if D_in == 1:
        # Outer product -> pure VPU broadcast-multiply, no MXU push needed.
        xg = x_ref[...] * wih0_ref[...] + b0_ref[...]
    else:
        xg = (jnp.dot(x_ref[...], wih0_ref[...],
                      preferred_element_type=jnp.float32) + b0_ref[...])
    xg = xg.reshape(B, T, 4 * H)          # row b*T + t  ->  xg[b, t, :]

    whh0 = whh0_ref[...]
    w1 = w1_ref[...]
    b1 = b1_ref[...]

    def cell(gates, c):
        # Two full-vreg EUP passes instead of four 32-lane sliced ones.
        sig = jax.nn.sigmoid(gates)
        tnh = jnp.tanh(gates)
        i = sig[:, 0 * H:1 * H]           # PyTorch gate order: i, f, g, o
        f = sig[:, 1 * H:2 * H]
        g = tnh[:, 2 * H:3 * H]
        o = sig[:, 3 * H:4 * H]
        c_new = f * c + i * g
        h_new = o * jnp.tanh(c_new)
        return h_new, c_new

    zeros = jnp.zeros((B, H), dtype=jnp.float32)
    h0, c0, h1, c1 = zeros, zeros, zeros, zeros

    # Fully unrolled recurrence (T static & small; live state is a handful of
    # vregs), giving the scheduler cross-step visibility.
    for t in range(T):
        # Layer 0: input term precomputed above -> single recurrent matmul.
        g0 = xg[:, t, :] + jnp.dot(h0, whh0, preferred_element_type=jnp.float32)
        h0, c0 = cell(g0, c0)
        # Inter-layer dropout: identity in eval mode.
        # Layer 1: input + recurrent matmuls fused into ONE MXU push.
        g1 = jnp.dot(jnp.concatenate([h0, h1], axis=1), w1,
                     preferred_element_type=jnp.float32) + b1
        h1, c1 = cell(g1, c1)

    # Final dropout = identity (eval); fc head on last-step top-layer output.
    out_ref[...] = (jnp.dot(h1, wfc_ref[...], preferred_element_type=jnp.float32)
                    + bfc_ref[...]).astype(out_ref.dtype)


@jax.jit
def lstm_model_forward(x_btd, kparams):
    """x_btd: (B, T, D_in) float32, PyTorch batch_first layout."""
    B, T, D = x_btd.shape
    x_flat = x_btd.reshape(B * T, D)      # no transpose: projection is hoisted

    vmem = pl.BlockSpec(memory_space=pltpu.MemorySpace.VMEM)
    args = (
        x_flat,
        kparams["wih0_t"], kparams["whh0_t"], kparams["b0"],
        kparams["w1"], kparams["b1"],
        kparams["wfc_t"], kparams["bfc"],
    )
    return pl.pallas_call(
        _lstm_kernel,
        out_shape=jax.ShapeDtypeStruct((B, OUTPUT_DIM), jnp.float32),
        in_specs=[vmem] * len(args),
        out_specs=vmem,
    )(*args)


def init_torch_params(key, input_dim=INPUT_DIM, hidden_dim=HIDDEN_DIM,
                      output_dim=OUTPUT_DIM):
    """PyTorch-shaped params with U(-1/sqrt(H), 1/sqrt(H)) init."""
    ks = jax.random.split(key, 10)
    bound = 1.0 / jnp.sqrt(hidden_dim)

    def u(k, shape):
        return jax.random.uniform(k, shape, jnp.float32, -bound, bound)

    return {
        "wih0": u(ks[0], (4 * hidden_dim, input_dim)),
        "whh0": u(ks[1], (4 * hidden_dim, hidden_dim)),
        "bih0": u(ks[2], (4 * hidden_dim,)),
        "bhh0": u(ks[3], (4 * hidden_dim,)),
        "wih1": u(ks[4], (4 * hidden_dim, hidden_dim)),
        "whh1": u(ks[5], (4 * hidden_dim, hidden_dim)),
        "bih1": u(ks[6], (4 * hidden_dim,)),
        "bhh1": u(ks[7], (4 * hidden_dim,)),
        "wfc":  u(ks[8], (output_dim, hidden_dim)),
        "bfc":  u(ks[9], (output_dim,)),
    }


def prepare_kernel_params(p):
    """Kernel layout: transposed weights, fused biases, stacked layer-1 W."""
    return {
        "wih0_t": p["wih0"].T,                                   # (D_in, 4H)
        "whh0_t": p["whh0"].T,                                   # (H, 4H)
        "b0": (p["bih0"] + p["bhh0"]).reshape(1, -1),            # (1, 4H)
        "w1": jnp.concatenate([p["wih1"].T, p["whh1"].T], 0),    # (2H, 4H)
        "b1": (p["bih1"] + p["bhh1"]).reshape(1, -1),            # (1, 4H)
        "wfc_t": p["wfc"].T,                                     # (H, O)
        "bfc": p["bfc"].reshape(1, -1),                          # (1, O)
    }


def reference_forward(x_btd, p, hidden_dim=HIDDEN_DIM):
    """Pure-JAX reference of the PyTorch forward (eval mode)."""
    H = hidden_dim
    B, T, _ = x_btd.shape
    hp = lax.Precision.HIGHEST

    def cell(x_t, h, c, wih, whh, bih, bhh):
        g = (jnp.dot(x_t, wih.T, precision=hp)
             + jnp.dot(h, whh.T, precision=hp) + bih + bhh)
        i = jax.nn.sigmoid(g[:, 0 * H:1 * H])
        f = jax.nn.sigmoid(g[:, 1 * H:2 * H])
        gg = jnp.tanh(g[:, 2 * H:3 * H])
        o = jax.nn.sigmoid(g[:, 3 * H:4 * H])
        c = f * c + i * gg
        return o * jnp.tanh(c), c

    h0 = c0 = h1 = c1 = jnp.zeros((B, H), jnp.float32)
    for t in range(T):
        x_t = x_btd[:, t, :]
        h0, c0 = cell(x_t, h0, c0, p["wih0"], p["whh0"], p["bih0"], p["bhh0"])
        h1, c1 = cell(h0, h1, c1, p["wih1"], p["whh1"], p["bih1"], p["bhh1"])
    return jnp.dot(h1, p["wfc"].T, precision=hp) + p["bfc"].reshape(1, -1)


if __name__ == "__main__":
    key = jax.random.PRNGKey(0)
    k_x, k_p = jax.random.split(key)

    B, T = 4, 8
    x = jax.random.normal(k_x, (B, T, INPUT_DIM), dtype=jnp.float32)

    torch_params = init_torch_params(k_p)
    kparams = prepare_kernel_params(torch_params)

    out = lstm_model_forward(x, kparams)
    out = jax.block_until_ready(out)

    ref = reference_forward(x, torch_params)
    assert out.shape == (B, OUTPUT_DIM), out.shape
    assert jnp.allclose(out, ref, atol=1e-5, rtol=1e-5), (out, ref)

    print("KERNEL_OK")
</pallas_src>

<mosaic_0001>
module attributes {stable_mosaic.version = 11 : i64} {
  func.func @_lstm_kernel(%arg0: memref<32x1xf32, #tpu.memory_space<vmem>>, %arg1: memref<1x128xf32, #tpu.memory_space<vmem>>, %arg2: memref<32x128xf32, #tpu.memory_space<vmem>>, %arg3: memref<1x128xf32, #tpu.memory_space<vmem>>, %arg4: memref<64x128xf32, #tpu.memory_space<vmem>>, %arg5: memref<1x128xf32, #tpu.memory_space<vmem>>, %arg6: memref<32x1xf32, #tpu.memory_space<vmem>>, %arg7: memref<1x1xf32, #tpu.memory_space<vmem>>, %arg8: memref<4x1xf32, #tpu.memory_space<vmem>>) attributes {dimension_semantics = [], scalar_prefetch = 0 : i64, scratch_operands = 0 : i64, tpu.core_type = #tpu.core_type<tc>} {
    %c0 = arith.constant 0 : index
    %c0_0 = arith.constant 0 : index
    %0 = vector.load %arg0[%c0, %c0_0] : memref<32x1xf32, #tpu.memory_space<vmem>>, vector<32x1xf32>
    %c0_1 = arith.constant 0 : index
    %c0_2 = arith.constant 0 : index
    %1 = vector.load %arg1[%c0_1, %c0_2] : memref<1x128xf32, #tpu.memory_space<vmem>>, vector<1x128xf32>
    %2 = vector.broadcast %0 : vector<32x1xf32> to vector<32x128xf32>
    %3 = vector.broadcast %1 : vector<1x128xf32> to vector<32x128xf32>
    %4 = arith.mulf %2, %3 : vector<32x128xf32>
    %c0_3 = arith.constant 0 : index
    %c0_4 = arith.constant 0 : index
    %5 = vector.load %arg3[%c0_3, %c0_4] : memref<1x128xf32, #tpu.memory_space<vmem>>, vector<1x128xf32>
    %6 = vector.broadcast %5 : vector<1x128xf32> to vector<32x128xf32>
    %7 = arith.addf %4, %6 : vector<32x128xf32>
    %8 = vector.shape_cast %7 : vector<32x128xf32> to vector<4x8x128xf32>
    %c0_5 = arith.constant 0 : index
    %c0_6 = arith.constant 0 : index
    %9 = vector.load %arg2[%c0_5, %c0_6] : memref<32x128xf32, #tpu.memory_space<vmem>>, vector<32x128xf32>
    %c0_7 = arith.constant 0 : index
    %c0_8 = arith.constant 0 : index
    %10 = vector.load %arg4[%c0_7, %c0_8] : memref<64x128xf32, #tpu.memory_space<vmem>>, vector<64x128xf32>
    %c0_9 = arith.constant 0 : index
    %c0_10 = arith.constant 0 : index
    %11 = vector.load %arg5[%c0_9, %c0_10] : memref<1x128xf32, #tpu.memory_space<vmem>>, vector<1x128xf32>
    %cst = arith.constant 0.000000e+00 : f32
    %12 = vector.broadcast %cst : f32 to vector<4x32xf32>
    %13 = vector.extract_strided_slice %8 {offsets = [0, 0, 0], sizes = [4, 1, 128], strides = [1, 1, 1]} : vector<4x8x128xf32> to vector<4x1x128xf32>
    %14 = vector.shape_cast %13 : vector<4x1x128xf32> to vector<4x128xf32>
    %cst_11 = arith.constant dense<0.000000e+00> : vector<4x128xf32>
    %15 = tpu.matmul %12, %9, %cst_11 {dimension_numbers = #tpu.dot_dimension_numbers<[1], [0], [0], [1], [0, 0, 1, 1], [], []>} : vector<4x32xf32>, vector<32x128xf32>, vector<4x128xf32> -> vector<4x128xf32>
    %16 = arith.addf %14, %15 : vector<4x128xf32>
    %17 = arith.negf %16 : vector<4x128xf32>
    %18 = math.exp %17 : vector<4x128xf32>
    %cst_12 = arith.constant 1.000000e+00 : f32
    %19 = vector.broadcast %cst_12 : f32 to vector<4x128xf32>
    %20 = arith.addf %19, %18 : vector<4x128xf32>
    %21 = arith.divf %19, %20 : vector<4x128xf32>
    %22 = math.tanh %16 : vector<4x128xf32>
    %23 = vector.extract_strided_slice %21 {offsets = [0, 0], sizes = [4, 32], strides = [1, 1]} : vector<4x128xf32> to vector<4x32xf32>
    %24 = vector.extract_strided_slice %21 {offsets = [0, 32], sizes = [4, 32], strides = [1, 1]} : vector<4x128xf32> to vector<4x32xf32>
    %25 = vector.extract_strided_slice %22 {offsets = [0, 64], sizes = [4, 32], strides = [1, 1]} : vector<4x128xf32> to vector<4x32xf32>
    %26 = vector.extract_strided_slice %21 {offsets = [0, 96], sizes = [4, 32], strides = [1, 1]} : vector<4x128xf32> to vector<4x32xf32>
    %27 = arith.mulf %24, %12 : vector<4x32xf32>
    %28 = arith.mulf %23, %25 : vector<4x32xf32>
    %29 = arith.addf %27, %28 : vector<4x32xf32>
    %30 = math.tanh %29 : vector<4x32xf32>
    %31 = arith.mulf %26, %30 : vector<4x32xf32>
    %32 = tpu.concatenate %31, %12 in 1 : vector<4x32xf32>, vector<4x32xf32> -> vector<4x64xf32>
    %cst_13 = arith.constant dense<0.000000e+00> : vector<4x128xf32>
    %33 = tpu.matmul %32, %10, %cst_13 {dimension_numbers = #tpu.dot_dimension_numbers<[1], [0], [0], [1], [0, 0, 1, 1], [], []>} : vector<4x64xf32>, vector<64x128xf32>, vector<4x128xf32> -> vector<4x128xf32>
    %34 = vector.broadcast %11 : vector<1x128xf32> to vector<4x128xf32>
    %35 = arith.addf %33, %34 : vector<4x128xf32>
    %36 = arith.negf %35 : vector<4x128xf32>
    %37 = math.exp %36 : vector<4x128xf32>
    %cst_14 = arith.constant 1.000000e+00 : f32
    %38 = vector.broadcast %cst_14 : f32 to vector<4x128xf32>
    %39 = arith.addf %38, %37 : vector<4x128xf32>
    %40 = arith.divf %38, %39 : vector<4x128xf32>
    %41 = math.tanh %35 : vector<4x128xf32>
    %42 = vector.extract_strided_slice %40 {offsets = [0, 0], sizes = [4, 32], strides = [1, 1]} : vector<4x128xf32> to vector<4x32xf32>
    %43 = vector.extract_strided_slice %40 {offsets = [0, 32], sizes = [4, 32], strides = [1, 1]} : vector<4x128xf32> to vector<4x32xf32>
    %44 = vector.extract_strided_slice %41 {offsets = [0, 64], sizes = [4, 32], strides = [1, 1]} : vector<4x128xf32> to vector<4x32xf32>
    %45 = vector.extract_strided_slice %40 {offsets = [0, 96], sizes = [4, 32], strides = [1, 1]} : vector<4x128xf32> to vector<4x32xf32>
    %46 = arith.mulf %43, %12 : vector<4x32xf32>
    %47 = arith.mulf %42, %44 : vector<4x32xf32>
    %48 = arith.addf %46, %47 : vector<4x32xf32>
    %49 = math.tanh %48 : vector<4x32xf32>
    %50 = arith.mulf %45, %49 : vector<4x32xf32>
    %51 = vector.extract_strided_slice %8 {offsets = [0, 1, 0], sizes = [4, 1, 128], strides = [1, 1, 1]} : vector<4x8x128xf32> to vector<4x1x128xf32>
    %52 = vector.shape_cast %51 : vector<4x1x128xf32> to vector<4x128xf32>
    %cst_15 = arith.constant dense<0.000000e+00> : vector<4x128xf32>
    %53 = tpu.matmul %31, %9, %cst_15 {dimension_numbers = #tpu.dot_dimension_numbers<[1], [0], [0], [1], [0, 0, 1, 1], [], []>} : vector<4x32xf32>, vector<32x128xf32>, vector<4x128xf32> -> vector<4x128xf32>
    %54 = arith.addf %52, %53 : vector<4x128xf32>
    %55 = arith.negf %54 : vector<4x128xf32>
    %56 = math.exp %55 : vector<4x128xf32>
    %cst_16 = arith.constant 1.000000e+00 : f32
    %57 = vector.broadcast %cst_16 : f32 to vector<4x128xf32>
    %58 = arith.addf %57, %56 : vector<4x128xf32>
    %59 = arith.divf %57, %58 : vector<4x128xf32>
    %60 = math.tanh %54 : vector<4x128xf32>
    %61 = vector.extract_strided_slice %59 {offsets = [0, 0], sizes = [4, 32], strides = [1, 1]} : vector<4x128xf32> to vector<4x32xf32>
    %62 = vector.extract_strided_slice %59 {offsets = [0, 32], sizes = [4, 32], strides = [1, 1]} : vector<4x128xf32> to vector<4x32xf32>
    %63 = vector.extract_strided_slice %60 {offsets = [0, 64], sizes = [4, 32], strides = [1, 1]} : vector<4x128xf32> to vector<4x32xf32>
    %64 = vector.extract_strided_slice %59 {offsets = [0, 96], sizes = [4, 32], strides = [1, 1]} : vector<4x128xf32> to vector<4x32xf32>
    %65 = arith.mulf %62, %29 : vector<4x32xf32>
    %66 = arith.mulf %61, %63 : vector<4x32xf32>
    %67 = arith.addf %65, %66 : vector<4x32xf32>
    %68 = math.tanh %67 : vector<4x32xf32>
    %69 = arith.mulf %64, %68 : vector<4x32xf32>
    %70 = tpu.concatenate %69, %50 in 1 : vector<4x32xf32>, vector<4x32xf32> -> vector<4x64xf32>
    %cst_17 = arith.constant dense<0.000000e+00> : vector<4x128xf32>
    %71 = tpu.matmul %70, %10, %cst_17 {dimension_numbers = #tpu.dot_dimension_numbers<[1], [0], [0], [1], [0, 0, 1, 1], [], []>} : vector<4x64xf32>, vector<64x128xf32>, vector<4x128xf32> -> vector<4x128xf32>
    %72 = vector.broadcast %11 : vector<1x128xf32> to vector<4x128xf32>
    %73 = arith.addf %71, %72 : vector<4x128xf32>
    %74 = arith.negf %73 : vector<4x128xf32>
    %75 = math.exp %74 : vector<4x128xf32>
    %cst_18 = arith.constant 1.000000e+00 : f32
    %76 = vector.broadcast %cst_18 : f32 to vector<4x128xf32>
    %77 = arith.addf %76, %75 : vector<4x128xf32>
    %78 = arith.divf %76, %77 : vector<4x128xf32>
    %79 = math.tanh %73 : vector<4x128xf32>
    %80 = vector.extract_strided_slice %78 {offsets = [0, 0], sizes = [4, 32], strides = [1, 1]} : vector<4x128xf32> to vector<4x32xf32>
    %81 = vector.extract_strided_slice %78 {offsets = [0, 32], sizes = [4, 32], strides = [1, 1]} : vector<4x128xf32> to vector<4x32xf32>
    %82 = vector.extract_strided_slice %79 {offsets = [0, 64], sizes = [4, 32], strides = [1, 1]} : vector<4x128xf32> to vector<4x32xf32>
    %83 = vector.extract_strided_slice %78 {offsets = [0, 96], sizes = [4, 32], strides = [1, 1]} : vector<4x128xf32> to vector<4x32xf32>
    %84 = arith.mulf %81, %48 : vector<4x32xf32>
    %85 = arith.mulf %80, %82 : vector<4x32xf32>
    %86 = arith.addf %84, %85 : vector<4x32xf32>
    %87 = math.tanh %86 : vector<4x32xf32>
    %88 = arith.mulf %83, %87 : vector<4x32xf32>
    %89 = vector.extract_strided_slice %8 {offsets = [0, 2, 0], sizes = [4, 1, 128], strides = [1, 1, 1]} : vector<4x8x128xf32> to vector<4x1x128xf32>
    %90 = vector.shape_cast %89 : vector<4x1x128xf32> to vector<4x128xf32>
    %cst_19 = arith.constant dense<0.000000e+00> : vector<4x128xf32>
    %91 = tpu.matmul %69, %9, %cst_19 {dimension_numbers = #tpu.dot_dimension_numbers<[1], [0], [0], [1], [0, 0, 1, 1], [], []>} : vector<4x32xf32>, vector<32x128xf32>, vector<4x128xf32> -> vector<4x128xf32>
    %92 = arith.addf %90, %91 : vector<4x128xf32>
    %93 = arith.negf %92 : vector<4x128xf32>
    %94 = math.exp %93 : vector<4x128xf32>
    %cst_20 = arith.constant 1.000000e+00 : f32
    %95 = vector.broadcast %cst_20 : f32 to vector<4x128xf32>
    %96 = arith.addf %95, %94 : vector<4x128xf32>
    %97 = arith.divf %95, %96 : vector<4x128xf32>
    %98 = math.tanh %92 : vector<4x128xf32>
    %99 = vector.extract_strided_slice %97 {offsets = [0, 0], sizes = [4, 32], strides = [1, 1]} : vector<4x128xf32> to vector<4x32xf32>
    %100 = vector.extract_strided_slice %97 {offsets = [0, 32], sizes = [4, 32], strides = [1, 1]} : vector<4x128xf32> to vector<4x32xf32>
    %101 = vector.extract_strided_slice %98 {offsets = [0, 64], sizes = [4, 32], strides = [1, 1]} : vector<4x128xf32> to vector<4x32xf32>
    %102 = vector.extract_strided_slice %97 {offsets = [0, 96], sizes = [4, 32], strides = [1, 1]} : vector<4x128xf32> to vector<4x32xf32>
    %103 = arith.mulf %100, %67 : vector<4x32xf32>
    %104 = arith.mulf %99, %101 : vector<4x32xf32>
    %105 = arith.addf %103, %104 : vector<4x32xf32>
    %106 = math.tanh %105 : vector<4x32xf32>
    %107 = arith.mulf %102, %106 : vector<4x32xf32>
    %108 = tpu.concatenate %107, %88 in 1 : vector<4x32xf32>, vector<4x32xf32> -> vector<4x64xf32>
    %cst_21 = arith.constant dense<0.000000e+00> : vector<4x128xf32>
    %109 = tpu.matmul %108, %10, %cst_21 {dimension_numbers = #tpu.dot_dimension_numbers<[1], [0], [0], [1], [0, 0, 1, 1], [], []>} : vector<4x64xf32>, vector<64x128xf32>, vector<4x128xf32> -> vector<4x128xf32>
    %110 = vector.broadcast %11 : vector<1x128xf32> to vector<4x128xf32>
    %111 = arith.addf %109, %110 : vector<4x128xf32>
    %112 = arith.negf %111 : vector<4x128xf32>
    %113 = math.exp %112 : vector<4x128xf32>
    %cst_22 = arith.constant 1.000000e+00 : f32
    %114 = vector.broadcast %cst_22 : f32 to vector<4x128xf32>
    %115 = arith.addf %114, %113 : vector<4x128xf32>
    %116 = arith.divf %114, %115 : vector<4x128xf32>
    %117 = math.tanh %111 : vector<4x128xf32>
    %118 = vector.extract_strided_slice %116 {offsets = [0, 0], sizes = [4, 32], strides = [1, 1]} : vector<4x128xf32> to vector<4x32xf32>
    %119 = vector.extract_strided_slice %116 {offsets = [0, 32], sizes = [4, 32], strides = [1, 1]} : vector<4x128xf32> to vector<4x32xf32>
    %120 = vector.extract_strided_slice %117 {offsets = [0, 64], sizes = [4, 32], strides = [1, 1]} : vector<4x128xf32> to vector<4x32xf32>
    %121 = vector.extract_strided_slice %116 {offsets = [0, 96], sizes = [4, 32], strides = [1, 1]} : vector<4x128xf32> to vector<4x32xf32>
    %122 = arith.mulf %119, %86 : vector<4x32xf32>
    %123 = arith.mulf %118, %120 : vector<4x32xf32>
    %124 = arith.addf %122, %123 : vector<4x32xf32>
    %125 = math.tanh %124 : vector<4x32xf32>
    %126 = arith.mulf %121, %125 : vector<4x32xf32>
    %127 = vector.extract_strided_slice %8 {offsets = [0, 3, 0], sizes = [4, 1, 128], strides = [1, 1, 1]} : vector<4x8x128xf32> to vector<4x1x128xf32>
    %128 = vector.shape_cast %127 : vector<4x1x128xf32> to vector<4x128xf32>
    %cst_23 = arith.constant dense<0.000000e+00> : vector<4x128xf32>
    %129 = tpu.matmul %107, %9, %cst_23 {dimension_numbers = #tpu.dot_dimension_numbers<[1], [0], [0], [1], [0, 0, 1, 1], [], []>} : vector<4x32xf32>, vector<32x128xf32>, vector<4x128xf32> -> vector<4x128xf32>
    %130 = arith.addf %128, %129 : vector<4x128xf32>
    %131 = arith.negf %130 : vector<4x128xf32>
    %132 = math.exp %131 : vector<4x128xf32>
    %cst_24 = arith.constant 1.000000e+00 : f32
    %133 = vector.broadcast %cst_24 : f32 to vector<4x128xf32>
    %134 = arith.addf %133, %132 : vector<4x128xf32>
    %135 = arith.divf %133, %134 : vector<4x128xf32>
    %136 = math.tanh %130 : vector<4x128xf32>
    %137 = vector.extract_strided_slice %135 {offsets = [0, 0], sizes = [4, 32], strides = [1, 1]} : vector<4x128xf32> to vector<4x32xf32>
    %138 = vector.extract_strided_slice %135 {offsets = [0, 32], sizes = [4, 32], strides = [1, 1]} : vector<4x128xf32> to vector<4x32xf32>
    %139 = vector.extract_strided_slice %136 {offsets = [0, 64], sizes = [4, 32], strides = [1, 1]} : vector<4x128xf32> to vector<4x32xf32>
    %140 = vector.extract_strided_slice %135 {offsets = [0, 96], sizes = [4, 32], strides = [1, 1]} : vector<4x128xf32> to vector<4x32xf32>
    %141 = arith.mulf %138, %105 : vector<4x32xf32>
    %142 = arith.mulf %137, %139 : vector<4x32xf32>
    %143 = arith.addf %141, %142 : vector<4x32xf32>
    %144 = math.tanh %143 : vector<4x32xf32>
    %145 = arith.mulf %140, %144 : vector<4x32xf32>
    %146 = tpu.concatenate %145, %126 in 1 : vector<4x32xf32>, vector<4x32xf32> -> vector<4x64xf32>
    %cst_25 = arith.constant dense<0.000000e+00> : vector<4x128xf32>
    %147 = tpu.matmul %146, %10, %cst_25 {dimension_numbers = #tpu.dot_dimension_numbers<[1], [0], [0], [1], [0, 0, 1, 1], [], []>} : vector<4x64xf32>, vector<64x128xf32>, vector<4x128xf32> -> vector<4x128xf32>
    %148 = vector.broadcast %11 : vector<1x128xf32> to vector<4x128xf32>
    %149 = arith.addf %147, %148 : vector<4x128xf32>
    %150 = arith.negf %149 : vector<4x128xf32>
    %151 = math.exp %150 : vector<4x128xf32>
    %cst_26 = arith.constant 1.000000e+00 : f32
    %152 = vector.broadcast %cst_26 : f32 to vector<4x128xf32>
    %153 = arith.addf %152, %151 : vector<4x128xf32>
    %154 = arith.divf %152, %153 : vector<4x128xf32>
    %155 = math.tanh %149 : vector<4x128xf32>
    %156 = vector.extract_strided_slice %154 {offsets = [0, 0], sizes = [4, 32], strides = [1, 1]} : vector<4x128xf32> to vector<4x32xf32>
    %157 = vector.extract_strided_slice %154 {offsets = [0, 32], sizes = [4, 32], strides = [1, 1]} : vector<4x128xf32> to vector<4x32xf32>
    %158 = vector.extract_strided_slice %155 {offsets = [0, 64], sizes = [4, 32], strides = [1, 1]} : vector<4x128xf32> to vector<4x32xf32>
    %159 = vector.extract_strided_slice %154 {offsets = [0, 96], sizes = [4, 32], strides = [1, 1]} : vector<4x128xf32> to vector<4x32xf32>
    %160 = arith.mulf %157, %124 : vector<4x32xf32>
    %161 = arith.mulf %156, %158 : vector<4x32xf32>
    %162 = arith.addf %160, %161 : vector<4x32xf32>
    %163 = math.tanh %162 : vector<4x32xf32>
    %164 = arith.mulf %159, %163 : vector<4x32xf32>
    %165 = vector.extract_strided_slice %8 {offsets = [0, 4, 0], sizes = [4, 1, 128], strides = [1, 1, 1]} : vector<4x8x128xf32> to vector<4x1x128xf32>
    %166 = vector.shape_cast %165 : vector<4x1x128xf32> to vector<4x128xf32>
    %cst_27 = arith.constant dense<0.000000e+00> : vector<4x128xf32>
    %167 = tpu.matmul %145, %9, %cst_27 {dimension_numbers = #tpu.dot_dimension_numbers<[1], [0], [0], [1], [0, 0, 1, 1], [], []>} : vector<4x32xf32>, vector<32x128xf32>, vector<4x128xf32> -> vector<4x128xf32>
    %168 = arith.addf %166, %167 : vector<4x128xf32>
    %169 = arith.negf %168 : vector<4x128xf32>
    %170 = math.exp %169 : vector<4x128xf32>
    %cst_28 = arith.constant 1.000000e+00 : f32
    %171 = vector.broadcast %cst_28 : f32 to vector<4x128xf32>
    %172 = arith.addf %171, %170 : vector<4x128xf32>
    %173 = arith.divf %171, %172 : vector<4x128xf32>
    %174 = math.tanh %168 : vector<4x128xf32>
    %175 = vector.extract_strided_slice %173 {offsets = [0, 0], sizes = [4, 32], strides = [1, 1]} : vector<4x128xf32> to vector<4x32xf32>
    %176 = vector.extract_strided_slice %173 {offsets = [0, 32], sizes = [4, 32], strides = [1, 1]} : vector<4x128xf32> to vector<4x32xf32>
    %177 = vector.extract_strided_slice %174 {offsets = [0, 64], sizes = [4, 32], strides = [1, 1]} : vector<4x128xf32> to vector<4x32xf32>
    %178 = vector.extract_strided_slice %173 {offsets = [0, 96], sizes = [4, 32], strides = [1, 1]} : vector<4x128xf32> to vector<4x32xf32>
    %179 = arith.mulf %176, %143 : vector<4x32xf32>
    %180 = arith.mulf %175, %177 : vector<4x32xf32>
    %181 = arith.addf %179, %180 : vector<4x32xf32>
    %182 = math.tanh %181 : vector<4x32xf32>
    %183 = arith.mulf %178, %182 : vector<4x32xf32>
    %184 = tpu.concatenate %183, %164 in 1 : vector<4x32xf32>, vector<4x32xf32> -> vector<4x64xf32>
    %cst_29 = arith.constant dense<0.000000e+00> : vector<4x128xf32>
    %185 = tpu.matmul %184, %10, %cst_29 {dimension_numbers = #tpu.dot_dimension_numbers<[1], [0], [0], [1], [0, 0, 1, 1], [], []>} : vector<4x64xf32>, vector<64x128xf32>, vector<4x128xf32> -> vector<4x128xf32>
    %186 = vector.broadcast %11 : vector<1x128xf32> to vector<4x128xf32>
    %187 = arith.addf %185, %186 : vector<4x128xf32>
    %188 = arith.negf %187 : vector<4x128xf32>
    %189 = math.exp %188 : vector<4x128xf32>
    %cst_30 = arith.constant 1.000000e+00 : f32
    %190 = vector.broadcast %cst_30 : f32 to vector<4x128xf32>
    %191 = arith.addf %190, %189 : vector<4x128xf32>
    %192 = arith.divf %190, %191 : vector<4x128xf32>
    %193 = math.tanh %187 : vector<4x128xf32>
    %194 = vector.extract_strided_slice %192 {offsets = [0, 0], sizes = [4, 32], strides = [1, 1]} : vector<4x128xf32> to vector<4x32xf32>
    %195 = vector.extract_strided_slice %192 {offsets = [0, 32], sizes = [4, 32], strides = [1, 1]} : vector<4x128xf32> to vector<4x32xf32>
    %196 = vector.extract_strided_slice %193 {offsets = [0, 64], sizes = [4, 32], strides = [1, 1]} : vector<4x128xf32> to vector<4x32xf32>
    %197 = vector.extract_strided_slice %192 {offsets = [0, 96], sizes = [4, 32], strides = [1, 1]} : vector<4x128xf32> to vector<4x32xf32>
    %198 = arith.mulf %195, %162 : vector<4x32xf32>
    %199 = arith.mulf %194, %196 : vector<4x32xf32>
    %200 = arith.addf %198, %199 : vector<4x32xf32>
    %201 = math.tanh %200 : vector<4x32xf32>
    %202 = arith.mulf %197, %201 : vector<4x32xf32>
    %203 = vector.extract_strided_slice %8 {offsets = [0, 5, 0], sizes = [4, 1, 128], strides = [1, 1, 1]} : vector<4x8x128xf32> to vector<4x1x128xf32>
    %204 = vector.shape_cast %203 : vector<4x1x128xf32> to vector<4x128xf32>
    %cst_31 = arith.constant dense<0.000000e+00> : vector<4x128xf32>
    %205 = tpu.matmul %183, %9, %cst_31 {dimension_numbers = #tpu.dot_dimension_numbers<[1], [0], [0], [1], [0, 0, 1, 1], [], []>} : vector<4x32xf32>, vector<32x128xf32>, vector<4x128xf32> -> vector<4x128xf32>
    %206 = arith.addf %204, %205 : vector<4x128xf32>
    %207 = arith.negf %206 : vector<4x128xf32>
    %208 = math.exp %207 : vector<4x128xf32>
    %cst_32 = arith.constant 1.000000e+00 : f32
    %209 = vector.broadcast %cst_32 : f32 to vector<4x128xf32>
    %210 = arith.addf %209, %208 : vector<4x128xf32>
    %211 = arith.divf %209, %210 : vector<4x128xf32>
    %212 = math.tanh %206 : vector<4x128xf32>
    %213 = vector.extract_strided_slice %211 {offsets = [0, 0], sizes = [4, 32], strides = [1, 1]} : vector<4x128xf32> to vector<4x32xf32>
    %214 = vector.extract_strided_slice %211 {offsets = [0, 32], sizes = [4, 32], strides = [1, 1]} : vector<4x128xf32> to vector<4x32xf32>
    %215 = vector.extract_strided_slice %212 {offsets = [0, 64], sizes = [4, 32], strides = [1, 1]} : vector<4x128xf32> to vector<4x32xf32>
    %216 = vector.extract_strided_slice %211 {offsets = [0, 96], sizes = [4, 32], strides = [1, 1]} : vector<4x128xf32> to vector<4x32xf32>
    %217 = arith.mulf %214, %181 : vector<4x32xf32>
    %218 = arith.mulf %213, %215 : vector<4x32xf32>
    %219 = arith.addf %217, %218 : vector<4x32xf32>
    %220 = math.tanh %219 : vector<4x32xf32>
    %221 = arith.mulf %216, %220 : vector<4x32xf32>
    %222 = tpu.concatenate %221, %202 in 1 : vector<4x32xf32>, vector<4x32xf32> -> vector<4x64xf32>
    %cst_33 = arith.constant dense<0.000000e+00> : vector<4x128xf32>
    %223 = tpu.matmul %222, %10, %cst_33 {dimension_numbers = #tpu.dot_dimension_numbers<[1], [0], [0], [1], [0, 0, 1, 1], [], []>} : vector<4x64xf32>, vector<64x128xf32>, vector<4x128xf32> -> vector<4x128xf32>
    %224 = vector.broadcast %11 : vector<1x128xf32> to vector<4x128xf32>
    %225 = arith.addf %223, %224 : vector<4x128xf32>
    %226 = arith.negf %225 : vector<4x128xf32>
    %227 = math.exp %226 : vector<4x128xf32>
    %cst_34 = arith.constant 1.000000e+00 : f32
    %228 = vector.broadcast %cst_34 : f32 to vector<4x128xf32>
    %229 = arith.addf %228, %227 : vector<4x128xf32>
    %230 = arith.divf %228, %229 : vector<4x128xf32>
    %231 = math.tanh %225 : vector<4x128xf32>
    %232 = vector.extract_strided_slice %230 {offsets = [0, 0], sizes = [4, 32], strides = [1, 1]} : vector<4x128xf32> to vector<4x32xf32>
    %233 = vector.extract_strided_slice %230 {offsets = [0, 32], sizes = [4, 32], strides = [1, 1]} : vector<4x128xf32> to vector<4x32xf32>
    %234 = vector.extract_strided_slice %231 {offsets = [0, 64], sizes = [4, 32], strides = [1, 1]} : vector<4x128xf32> to vector<4x32xf32>
    %235 = vector.extract_strided_slice %230 {offsets = [0, 96], sizes = [4, 32], strides = [1, 1]} : vector<4x128xf32> to vector<4x32xf32>
    %236 = arith.mulf %233, %200 : vector<4x32xf32>
    %237 = arith.mulf %232, %234 : vector<4x32xf32>
    %238 = arith.addf %236, %237 : vector<4x32xf32>
    %239 = math.tanh %238 : vector<4x32xf32>
    %240 = arith.mulf %235, %239 : vector<4x32xf32>
    %241 = vector.extract_strided_slice %8 {offsets = [0, 6, 0], sizes = [4, 1, 128], strides = [1, 1, 1]} : vector<4x8x128xf32> to vector<4x1x128xf32>
    %242 = vector.shape_cast %241 : vector<4x1x128xf32> to vector<4x128xf32>
    %cst_35 = arith.constant dense<0.000000e+00> : vector<4x128xf32>
    %243 = tpu.matmul %221, %9, %cst_35 {dimension_numbers = #tpu.dot_dimension_numbers<[1], [0], [0], [1], [0, 0, 1, 1], [], []>} : vector<4x32xf32>, vector<32x128xf32>, vector<4x128xf32> -> vector<4x128xf32>
    %244 = arith.addf %242, %243 : vector<4x128xf32>
    %245 = arith.negf %244 : vector<4x128xf32>
    %246 = math.exp %245 : vector<4x128xf32>
    %cst_36 = arith.constant 1.000000e+00 : f32
    %247 = vector.broadcast %cst_36 : f32 to vector<4x128xf32>
    %248 = arith.addf %247, %246 : vector<4x128xf32>
    %249 = arith.divf %247, %248 : vector<4x128xf32>
    %250 = math.tanh %244 : vector<4x128xf32>
    %251 = vector.extract_strided_slice %249 {offsets = [0, 0], sizes = [4, 32], strides = [1, 1]} : vector<4x128xf32> to vector<4x32xf32>
    %252 = vector.extract_strided_slice %249 {offsets = [0, 32], sizes = [4, 32], strides = [1, 1]} : vector<4x128xf32> to vector<4x32xf32>
    %253 = vector.extract_strided_slice %250 {offsets = [0, 64], sizes = [4, 32], strides = [1, 1]} : vector<4x128xf32> to vector<4x32xf32>
    %254 = vector.extract_strided_slice %249 {offsets = [0, 96], sizes = [4, 32], strides = [1, 1]} : vector<4x128xf32> to vector<4x32xf32>
    %255 = arith.mulf %252, %219 : vector<4x32xf32>
    %256 = arith.mulf %251, %253 : vector<4x32xf32>
    %257 = arith.addf %255, %256 : vector<4x32xf32>
    %258 = math.tanh %257 : vector<4x32xf32>
    %259 = arith.mulf %254, %258 : vector<4x32xf32>
    %260 = tpu.concatenate %259, %240 in 1 : vector<4x32xf32>, vector<4x32xf32> -> vector<4x64xf32>
    %cst_37 = arith.constant dense<0.000000e+00> : vector<4x128xf32>
    %261 = tpu.matmul %260, %10, %cst_37 {dimension_numbers = #tpu.dot_dimension_numbers<[1], [0], [0], [1], [0, 0, 1, 1], [], []>} : vector<4x64xf32>, vector<64x128xf32>, vector<4x128xf32> -> vector<4x128xf32>
    %262 = vector.broadcast %11 : vector<1x128xf32> to vector<4x128xf32>
    %263 = arith.addf %261, %262 : vector<4x128xf32>
    %264 = arith.negf %263 : vector<4x128xf32>
    %265 = math.exp %264 : vector<4x128xf32>
    %cst_38 = arith.constant 1.000000e+00 : f32
    %266 = vector.broadcast %cst_38 : f32 to vector<4x128xf32>
    %267 = arith.addf %266, %265 : vector<4x128xf32>
    %268 = arith.divf %266, %267 : vector<4x128xf32>
    %269 = math.tanh %263 : vector<4x128xf32>
    %270 = vector.extract_strided_slice %268 {offsets = [0, 0], sizes = [4, 32], strides = [1, 1]} : vector<4x128xf32> to vector<4x32xf32>
    %271 = vector.extract_strided_slice %268 {offsets = [0, 32], sizes = [4, 32], strides = [1, 1]} : vector<4x128xf32> to vector<4x32xf32>
    %272 = vector.extract_strided_slice %269 {offsets = [0, 64], sizes = [4, 32], strides = [1, 1]} : vector<4x128xf32> to vector<4x32xf32>
    %273 = vector.extract_strided_slice %268 {offsets = [0, 96], sizes = [4, 32], strides = [1, 1]} : vector<4x128xf32> to vector<4x32xf32>
    %274 = arith.mulf %271, %238 : vector<4x32xf32>
    %275 = arith.mulf %270, %272 : vector<4x32xf32>
    %276 = arith.addf %274, %275 : vector<4x32xf32>
    %277 = math.tanh %276 : vector<4x32xf32>
    %278 = arith.mulf %273, %277 : vector<4x32xf32>
    %279 = vector.extract_strided_slice %8 {offsets = [0, 7, 0], sizes = [4, 1, 128], strides = [1, 1, 1]} : vector<4x8x128xf32> to vector<4x1x128xf32>
    %280 = vector.shape_cast %279 : vector<4x1x128xf32> to vector<4x128xf32>
    %cst_39 = arith.constant dense<0.000000e+00> : vector<4x128xf32>
    %281 = tpu.matmul %259, %9, %cst_39 {dimension_numbers = #tpu.dot_dimension_numbers<[1], [0], [0], [1], [0, 0, 1, 1], [], []>} : vector<4x32xf32>, vector<32x128xf32>, vector<4x128xf32> -> vector<4x128xf32>
    %282 = arith.addf %280, %281 : vector<4x128xf32>
    %283 = arith.negf %282 : vector<4x128xf32>
    %284 = math.exp %283 : vector<4x128xf32>
    %cst_40 = arith.constant 1.000000e+00 : f32
    %285 = vector.broadcast %cst_40 : f32 to vector<4x128xf32>
    %286 = arith.addf %285, %284 : vector<4x128xf32>
    %287 = arith.divf %285, %286 : vector<4x128xf32>
    %288 = math.tanh %282 : vector<4x128xf32>
    %289 = vector.extract_strided_slice %287 {offsets = [0, 0], sizes = [4, 32], strides = [1, 1]} : vector<4x128xf32> to vector<4x32xf32>
    %290 = vector.extract_strided_slice %287 {offsets = [0, 32], sizes = [4, 32], strides = [1, 1]} : vector<4x128xf32> to vector<4x32xf32>
    %291 = vector.extract_strided_slice %288 {offsets = [0, 64], sizes = [4, 32], strides = [1, 1]} : vector<4x128xf32> to vector<4x32xf32>
    %292 = vector.extract_strided_slice %287 {offsets = [0, 96], sizes = [4, 32], strides = [1, 1]} : vector<4x128xf32> to vector<4x32xf32>
    %293 = arith.mulf %290, %257 : vector<4x32xf32>
    %294 = arith.mulf %289, %291 : vector<4x32xf32>
    %295 = arith.addf %293, %294 : vector<4x32xf32>
    %296 = math.tanh %295 : vector<4x32xf32>
    %297 = arith.mulf %292, %296 : vector<4x32xf32>
    %298 = tpu.concatenate %297, %278 in 1 : vector<4x32xf32>, vector<4x32xf32> -> vector<4x64xf32>
    %cst_41 = arith.constant dense<0.000000e+00> : vector<4x128xf32>
    %299 = tpu.matmul %298, %10, %cst_41 {dimension_numbers = #tpu.dot_dimension_numbers<[1], [0], [0], [1], [0, 0, 1, 1], [], []>} : vector<4x64xf32>, vector<64x128xf32>, vector<4x128xf32> -> vector<4x128xf32>
    %300 = vector.broadcast %11 : vector<1x128xf32> to vector<4x128xf32>
    %301 = arith.addf %299, %300 : vector<4x128xf32>
    %302 = arith.negf %301 : vector<4x128xf32>
    %303 = math.exp %302 : vector<4x128xf32>
    %cst_42 = arith.constant 1.000000e+00 : f32
    %304 = vector.broadcast %cst_42 : f32 to vector<4x128xf32>
    %305 = arith.addf %304, %303 : vector<4x128xf32>
    %306 = arith.divf %304, %305 : vector<4x128xf32>
    %307 = math.tanh %301 : vector<4x128xf32>
    %308 = vector.extract_strided_slice %306 {offsets = [0, 0], sizes = [4, 32], strides = [1, 1]} : vector<4x128xf32> to vector<4x32xf32>
    %309 = vector.extract_strided_slice %306 {offsets = [0, 32], sizes = [4, 32], strides = [1, 1]} : vector<4x128xf32> to vector<4x32xf32>
    %310 = vector.extract_strided_slice %307 {offsets = [0, 64], sizes = [4, 32], strides = [1, 1]} : vector<4x128xf32> to vector<4x32xf32>
    %311 = vector.extract_strided_slice %306 {offsets = [0, 96], sizes = [4, 32], strides = [1, 1]} : vector<4x128xf32> to vector<4x32xf32>
    %312 = arith.mulf %309, %276 : vector<4x32xf32>
    %313 = arith.mulf %308, %310 : vector<4x32xf32>
    %314 = arith.addf %312, %313 : vector<4x32xf32>
    %315 = math.tanh %314 : vector<4x32xf32>
    %316 = arith.mulf %311, %315 : vector<4x32xf32>
    %c0_43 = arith.constant 0 : index
    %c0_44 = arith.constant 0 : index
    %317 = vector.load %arg6[%c0_43, %c0_44] : memref<32x1xf32, #tpu.memory_space<vmem>>, vector<32x1xf32>
    %cst_45 = arith.constant dense<0.000000e+00> : vector<4x1xf32>
    %318 = tpu.matmul %316, %317, %cst_45 {dimension_numbers = #tpu.dot_dimension_numbers<[1], [0], [0], [1], [0, 0, 1, 1], [], []>} : vector<4x32xf32>, vector<32x1xf32>, vector<4x1xf32> -> vector<4x1xf32>
    %c0_46 = arith.constant 0 : index
    %c0_47 = arith.constant 0 : index
    %319 = vector.load %arg7[%c0_46, %c0_47] : memref<1x1xf32, #tpu.memory_space<vmem>>, vector<1x1xf32>
    %320 = vector.broadcast %319 : vector<1x1xf32> to vector<4x1xf32>
    %321 = arith.addf %318, %320 : vector<4x1xf32>
    %c0_48 = arith.constant 0 : index
    %c0_49 = arith.constant 0 : index
    %322 = vector.load %arg8[%c0_48, %c0_49] : memref<4x1xf32, #tpu.memory_space<vmem>>, vector<4x1xf32>
    tpu.vector_store %arg8[%c0_48, %c0_49], %321 {strides = array<i32>} : memref<4x1xf32, #tpu.memory_space<vmem>>, vector<4x1xf32>,
    return
  }
}

</mosaic_0001>

<llo_original>
// kernel: lstm_model_forward.1
$region0: #{lstm_model_forward.1}
  #allocation0 [shape = 'u32[]', space=smem, size = 0x4, offset = 0x4, fixed_abs, tag = 'smem constant byte address 0x4 - core index']
  #allocation1 [shape = 'u32[144,128]{1,0:T(1,128)}', space=vmem, size = 0x12000, scoped, tag = 'internal scratch']
  #allocation2 [shape = 'f32[1,1]{1,0:T(1,128)S(1)}', space=vmem, size = 0x200, scoped, tag = 'scoped memory for lstm_model_forward.1']
  %s0 = inlined_call_operand.vmem [shape: f32[32,1], index: 0, kind: input, shape index: {}]
  %s1 = inlined_call_operand.vmem [shape: f32[1,128], index: 1, kind: input, shape index: {}]
  %s2 = inlined_call_operand.vmem [shape: f32[32,128], index: 2, kind: input, shape index: {}]
  %s3 = inlined_call_operand.hbm [shape: f32[1,128], index: 3, kind: input, shape index: {}]
  %s4 = inlined_call_operand.vmem [shape: f32[64,128], index: 4, kind: input, shape index: {}]
  %s5 = inlined_call_operand.hbm [shape: f32[1,128], index: 5, kind: input, shape index: {}]
  %s6 = inlined_call_operand.vmem [shape: f32[32,1], index: 6, kind: input, shape index: {}]
  %s7 = inlined_call_operand.<no memory space> [shape: f32[1,1], index: 7, kind: input, shape index: {}]
  %s8 = inlined_call_operand.vmem [shape: f32[4,1], index: 8, kind: output, shape index: {}]
  %s9 = sld [smem:[#allocation0]]
  $region50: #{lstm_model_forward.1} parent=0
    _
  %s11 = ssub.s32 1, %s9
  %s12 = scalar_select 0, %s11, %s9
  %v13 = vstv %s7
  %14 = vst [vmem:[#allocation2] sm:$0x1] %v13
  $region1: #{lstm_model_forward.1} parent=0
    #allocation3 [shape = 'u8[512]{0}', space=vmem, size = 0x400, scoped, tag = 'input window, operand 3, single buffered']
    #allocation4 [shape = 's32[1]{0}', space=sflag, size = 0x4, scoped, tag = 'scoped memory for lstm_model_forward.1']
    #allocation5 [shape = 'u8[512]{0}', space=vmem, size = 0x400, scoped, tag = 'input window, operand 5, single buffered']
    #allocation6 [shape = 's32[1]{0}', space=sflag, size = 0x4, scoped, tag = 'scoped memory for lstm_model_forward.1']
    %15 = vsyncpa [#allocation4], 0
    %16 = vsyncpa [#allocation6], 0
    // Predicated region
    $region2: #{lstm_model_forward.1} parent=1 // pred_check
      _
    $region3: #{lstm_model_forward.1} parent=1 // pred_check_branch
      %18 = sbr.rel (0) target = $region5
    $region4: #{lstm_model_forward.1} parent=1 // pred_region
      _
    $region5: #{lstm_model_forward.1} parent=1 // pred_fallthru
      _
    // Predicated region
    $region6: #{lstm_model_forward.1} parent=1 // pred_check
      _
    $region7: #{lstm_model_forward.1} parent=1 // pred_check_branch
      %20 = sbr.rel (0) target = $region9
    $region8: #{lstm_model_forward.1} parent=1 // pred_region
      _
    $region9: #{lstm_model_forward.1} parent=1 // pred_fallthru
      _
    // Predicated region
    $region10: #{lstm_model_forward.1} parent=1 // pred_check
      _
    $region11: #{lstm_model_forward.1} parent=1 // pred_check_branch
      %22 = sbr.rel (0) target = $region13
    $region12: #{lstm_model_forward.1} parent=1 // pred_region
      _
    $region13: #{lstm_model_forward.1} parent=1 // pred_fallthru
      _
    // Predicated region
    $region14: #{lstm_model_forward.1} parent=1 // pred_check
      _
    $region15: #{lstm_model_forward.1} parent=1 // pred_check_branch
      %24 = sbr.rel (0) target = $region17
    $region16: #{lstm_model_forward.1} parent=1 // pred_region
      %s26 = ssub.s32 16, 16
      %27 = vsyncadd [#allocation4], %s26
      %s29 = sshll.u32 [#allocation3], 4
      %s30 = int_to_ptr.vmem [resolvable:$true] %s29
      %32 = dma.hbm_to_vmem [thread:$0]  %s3, 16, %s30, [#allocation4]
    $region17: #{lstm_model_forward.1} parent=1 // pred_fallthru
      _
    // Predicated region
    $region18: #{lstm_model_forward.1} parent=1 // pred_check
      _
    $region19: #{lstm_model_forward.1} parent=1 // pred_check_branch
      %34 = sbr.rel (0) target = $region21
    $region20: #{lstm_model_forward.1} parent=1 // pred_region
      _
    $region21: #{lstm_model_forward.1} parent=1 // pred_fallthru
      _
    // Predicated region
    $region22: #{lstm_model_forward.1} parent=1 // pred_check
      _
    $region23: #{lstm_model_forward.1} parent=1 // pred_check_branch
      %36 = sbr.rel (0) target = $region25
    $region24: #{lstm_model_forward.1} parent=1 // pred_region
      %s38 = ssub.s32 16, 16
      %39 = vsyncadd [#allocation6], %s38
      %s41 = sshll.u32 [#allocation5], 4
      %s42 = int_to_ptr.vmem [resolvable:$true] %s41
      %44 = dma.hbm_to_vmem [thread:$0]  %s5, 16, %s42, [#allocation6]
    $region25: #{lstm_model_forward.1} parent=1 // pred_fallthru
      _
    // Predicated region
    $region26: #{lstm_model_forward.1} parent=1 // pred_check
      _
    $region27: #{lstm_model_forward.1} parent=1 // pred_check_branch
      %46 = sbr.rel (0) target = $region29
    $region28: #{lstm_model_forward.1} parent=1 // pred_region
      _
    $region29: #{lstm_model_forward.1} parent=1 // pred_fallthru
      _
    // Predicated region
    $region30: #{lstm_model_forward.1} parent=1 // pred_check
      _
    $region31: #{lstm_model_forward.1} parent=1 // pred_check_branch
      %48 = sbr.rel (0) target = $region33
    $region32: #{lstm_model_forward.1} parent=1 // pred_region
      _
    $region33: #{lstm_model_forward.1} parent=1 // pred_fallthru
      _
    // Predicated region
    $region34: #{lstm_model_forward.1} parent=1 // pred_check
      _
    $region35: #{lstm_model_forward.1} parent=1 // pred_check_branch
      %50 = sbr.rel (0) target = $region37
    $region36: #{lstm_model_forward.1} parent=1 // pred_region
      %51 = dma.done [#allocation4], 16
    $region37: #{lstm_model_forward.1} parent=1 // pred_fallthru
      _
    // Predicated region
    $region38: #{lstm_model_forward.1} parent=1 // pred_check
      _
    $region39: #{lstm_model_forward.1} parent=1 // pred_check_branch
      %53 = sbr.rel (0) target = $region41
    $region40: #{lstm_model_forward.1} parent=1 // pred_region
      %54 = dma.done [#allocation6], 16
    $region41: #{lstm_model_forward.1} parent=1 // pred_fallthru
      _
    %v55 = vld [vmem:[%s0] sm:$0xff]
    %v56 = vld [vmem:[%s0 + $0x8] sm:$0xff]
    %v57 = vld [vmem:[%s0 + $0x10] sm:$0xff]
    %v58 = vld [vmem:[%s0 + $0x18] sm:$0xff]
    %v59 = vld [vmem:[%s1] sm:$0x1]
    %61 = vset.pattern.permute.xlu0 0
    %62 = vperm.xlu0 %61, %v55
    %v63 = vpop.permute.xlu0 %62
    %66 = vset.pattern.permute.xlu0 0
    %67 = vperm.xlu0 %66, %v56
    %v68 = vpop.permute.xlu0 %67
    %71 = vset.pattern.permute.xlu0 0
    %72 = vperm.xlu0 %71, %v57
    %v73 = vpop.permute.xlu0 %72
    %76 = vset.pattern.permute.xlu0 0
    %77 = vperm.xlu0 %76, %v58
    %v78 = vpop.permute.xlu0 %77
    %v81 = vlaneseq
    %v82 = vshrl.u32 %v81, 7
    %v83 = vsub.s32 0, %v82
    %v84 = vrot.slane %v59, %v83
    %v86 = vmul.f32 %v63, %v84
    %v87 = vmul.f32 %v68, %v84
    %v88 = vmul.f32 %v73, %v84
    %v89 = vmul.f32 %v78, %v84
    %v90 = vld [vmem:[#allocation3] sm:$0x1]
    %v92 = vlaneseq
    %v93 = vshrl.u32 %v92, 7
    %v94 = vsub.s32 0, %v93
    %v95 = vrot.slane %v90, %v94
    %v97 = vadd.f32 %v86, %v95
    %v98 = vadd.f32 %v87, %v95
    %v99 = vadd.f32 %v88, %v95
    %v100 = vadd.f32 %v89, %v95
    %v101 = vld [vmem:[%s2] sm:$0xff]
    %v102 = vld [vmem:[%s2 + $0x8] sm:$0xff]
    %v103 = vld [vmem:[%s2 + $0x10] sm:$0xff]
    %v104 = vld [vmem:[%s2 + $0x18] sm:$0xff]
    %v105 = vld [vmem:[%s4] sm:$0xff]
    %v106 = vld [vmem:[%s4 + $0x8] sm:$0xff]
    %v107 = vld [vmem:[%s4 + $0x10] sm:$0xff]
    %v108 = vld [vmem:[%s4 + $0x18] sm:$0xff]
    %v109 = vld [vmem:[%s4 + $0x20] sm:$0xff]
    %v110 = vld [vmem:[%s4 + $0x28] sm:$0xff]
    %v111 = vld [vmem:[%s4 + $0x30] sm:$0xff]
    %v112 = vld [vmem:[%s4 + $0x38] sm:$0xff]
    %v113 = vld [vmem:[#allocation5] sm:$0x1]
    %vm114 = vcmask 261120
    %v116 = vsel %vm114, 0.0, 0
    %118 = vmatprep.subr.mxu0 0.0
    %119 = vmatpush1.msra.mxu0 %v101
    %120 = vmatprep.subr.mxu0 0.0
    %121 = vmatpush1.msra.mxu0 %v102
    %122 = vmatprep.subr.mxu0 0.0
    %123 = vmatpush1.msra.mxu0 %v103
    %124 = vmatprep.subr.mxu0 0.0
    %125 = vmatpush1.msra.mxu0 %v104
    %126 = vmatprep.subr.mxu0 0.0
    %127 = vmatpush1.msra.mxu0 0.0
    %128 = vmatprep.subr.mxu0 0.0
    %129 = vmatpush1.msra.mxu0 0.0
    %130 = vmatprep.subr.mxu0 0.0
    %131 = vmatpush1.msra.mxu0 0.0
    %132 = vmatprep.subr.mxu0 0.0
    %133 = vmatpush1.msra.mxu0 0.0
    %134 = vmatprep.subr.mxu0 0.0
    %135 = vmatpush1.msra.mxu0 0.0
    %136 = vmatprep.subr.mxu0 0.0
    %137 = vmatpush1.msra.mxu0 0.0
    %138 = vmatprep.subr.mxu0 0.0
    %139 = vmatpush1.msra.mxu0 0.0
    %140 = vmatprep.subr.mxu0 0.0
    %141 = vmatpush1.msra.mxu0 0.0
    %142 = vmatprep.subr.mxu0 0.0
    %143 = vmatpush1.msra.mxu0 0.0
    %144 = vmatprep.subr.mxu0 0.0
    %145 = vmatpush1.msra.mxu0 0.0
    %146 = vmatprep.subr.mxu0 0.0
    %147 = vmatpush1.msra.mxu0 0.0
    %148 = vmatprep.subr.mxu0 0.0
    %149 = vmatpush1.msra.mxu0 0.0
    %150 = vmatprep.subr.mxu0 0.0
    %151 = vmatpush1.msra.mxu0 0.0
    %152 = vmatprep.subr.mxu0 0.0
    %153 = vmatpush1.msra.mxu0 0.0
    %154 = vmatprep.subr.mxu0 0.0
    %155 = vmatpush1.msra.mxu0 0.0
    %156 = vmatprep.subr.mxu0 0.0
    %157 = vmatpush1.msra.mxu0 0.0
    %158 = vmatprep.subr.mxu0 0.0
    %159 = vmatpush1.msra.mxu0 0.0
    %160 = vmatprep.subr.mxu0 0.0
    %161 = vmatpush1.msra.mxu0 0.0
    %162 = vmatprep.subr.mxu0 0.0
    %163 = vmatpush1.msra.mxu0 0.0
    %164 = vmatprep.subr.mxu0 0.0
    %165 = vmatpush1.msra.mxu0 0.0
    %166 = vmatprep.subr.mxu0 0.0
    %167 = vmatpush1.msra.mxu0 0.0
    %168 = vmatprep.subr.mxu0 0.0
    %169 = vmatpush1.msra.mxu0 0.0
    %170 = vmatprep.subr.mxu0 0.0
    %171 = vmatpush1.msra.mxu0 0.0
    %172 = vmatprep.subr.mxu0 0.0
    %173 = vmatpush1.msra.mxu0 0.0
    %174 = vmatprep.subr.mxu0 0.0
    %175 = vmatpush1.msra.mxu0 0.0
    %176 = vmatprep.subr.mxu0 0.0
    %177 = vmatpush1.msra.mxu0 0.0
    %178 = vmatprep.subr.mxu0 0.0
    %179 = vmatpush1.msra.mxu0 0.0
    %180 = vmatprep.subr.mxu0 0.0
    %181 = vmatpush1.msra.mxu0 0.0
    %182 = vmatprep.mubr.f32.mxu0 0.0
    %183 = vmatmul.mubr.f32.gmra.mrb[0].mxu0 %v116
    %v184 = vpop.f32.mrb[0].mxu0
    %v185 = vadd.f32 0.0, %v184
    %v186 = vpop.f32.mrb[0].mxu0
    %187 = vdwg.mxu0
    %v189 = vrot.slane %v185, 1
    %v190 = vrot.slane %v185, 2
    %v191 = vrot.slane %v185, 3
    %v196 = vadd.f32 %v97, %v185
    %v197 = vadd.f32 %v98, %v189
    %v198 = vadd.f32 %v99, %v190
    %v199 = vadd.f32 %v100, %v191
    %v200 = vxor.u32 %v196, 2147483648
    %v201 = vxor.u32 %v197, 2147483648
    %v202 = vxor.u32 %v198, 2147483648
    %v203 = vxor.u32 %v199, 2147483648
    %v204 = vmul.f32 %v200, 1.442695
    %v205 = vpow.pop %v204
    %v206 = vmul.f32 %v201, 1.442695
    %v207 = vpow.pop %v206
    %v208 = vmul.f32 %v202, 1.442695
    %v209 = vpow.pop %v208
    %v210 = vmul.f32 %v203, 1.442695
    %v211 = vpow.pop %v210
    %v212 = vadd.f32 %v205, 1.0
    %v213 = vadd.f32 %v207, 1.0
    %v214 = vadd.f32 %v209, 1.0
    %v215 = vadd.f32 %v211, 1.0
    %v216 = vrcp.pop %v212
    %v217 = vmul.f32 1.0, %v216
    %v218 = vrcp.pop %v213
    %v219 = vmul.f32 1.0, %v218
    %v220 = vrcp.pop %v214
    %v221 = vmul.f32 1.0, %v220
    %v222 = vrcp.pop %v215
    %v223 = vmul.f32 1.0, %v222
    %v224 = vtanh.pop %v196
    %v225 = vtanh.pop %v197
    %v226 = vtanh.pop %v198
    %v227 = vtanh.pop %v199
    %v228 = vmul.f32 %v217, 0.0
    %v229 = vmul.f32 %v219, 0.0
    %v230 = vmul.f32 %v221, 0.0
    %v231 = vmul.f32 %v223, 0.0
    %236 = vrot.lane.b32.xlu0 %v224, 64
    %v237 = vpop.permute.xlu0 %236
    %238 = vrot.lane.b32.xlu0 %v225, 64
    %v239 = vpop.permute.xlu0 %238
    %240 = vrot.lane.b32.xlu0 %v226, 64
    %v241 = vpop.permute.xlu0 %240
    %242 = vrot.lane.b32.xlu0 %v227, 64
    %v243 = vpop.permute.xlu0 %242
    %v248 = vmul.f32 %v217, %v237
    %v249 = vmul.f32 %v219, %v239
    %v250 = vmul.f32 %v221, %v241
    %v251 = vmul.f32 %v223, %v243
    %256 = vrot.lane.b32.xlu0 %v248, 32
    %v257 = vpop.permute.xlu0 %256
    %258 = vrot.lane.b32.xlu0 %v249, 32
    %v259 = vpop.permute.xlu0 %258
    %260 = vrot.lane.b32.xlu0 %v250, 32
    %v261 = vpop.permute.xlu0 %260
    %262 = vrot.lane.b32.xlu0 %v251, 32
    %v263 = vpop.permute.xlu0 %262
    %v268 = vadd.f32 %v228, %v257
    %v269 = vadd.f32 %v229, %v259
    %v270 = vadd.f32 %v230, %v261
    %v271 = vadd.f32 %v231, %v263
    %v272 = vtanh.pop %v268
    %v273 = vtanh.pop %v269
    %v274 = vtanh.pop %v270
    %v275 = vtanh.pop %v271
    %280 = vrot.lane.b32.xlu0 %v272, 64
    %v281 = vpop.permute.xlu0 %280
    %282 = vrot.lane.b32.xlu0 %v273, 64
    %v283 = vpop.permute.xlu0 %282
    %284 = vrot.lane.b32.xlu0 %v274, 64
    %v285 = vpop.permute.xlu0 %284
    %286 = vrot.lane.b32.xlu0 %v275, 64
    %v287 = vpop.permute.xlu0 %286
    %v292 = vmul.f32 %v217, %v281
    %v293 = vmul.f32 %v219, %v283
    %v294 = vmul.f32 %v221, %v285
    %v295 = vmul.f32 %v223, %v287
    %v300 = vrot.slane %v293, 7
    %vm301 = vcmask 1041409
    %v302 = vsel %vm301, %v300, %v292
    %v303 = vrot.slane %v294, 6
    %vm304 = vcmask 1042434
    %v305 = vsel %vm304, %v303, %v302
    %v306 = vrot.slane %v295, 5
    %vm307 = vcmask 1043459
    %v308 = vsel %vm307, %v306, %v305
    %309 = vrot.lane.b32.xlu0 %v308, 32
    %v310 = vpop.permute.xlu0 %309
    %v312 = vsel %vm114, %v310, 0.0
    %v314 = vlaneseq
    %v315 = vshrl.u32 %v314, 7
    %v316 = vsub.s32 0, %v315
    %v317 = vrot.slane %v113, %v316
    %vm319 = vcmask 523264
    %v321 = vsel %vm319, %v312, 0
    %323 = vmatprep.subr.mxu0 0.0
    %324 = vmatpush1.msra.mxu0 %v105
    %325 = vmatprep.subr.mxu0 0.0
    %326 = vmatpush1.msra.mxu0 %v106
    %327 = vmatprep.subr.mxu0 0.0
    %328 = vmatpush1.msra.mxu0 %v107
    %329 = vmatprep.subr.mxu0 0.0
    %330 = vmatpush1.msra.mxu0 %v108
    %331 = vmatprep.subr.mxu0 0.0
    %332 = vmatpush1.msra.mxu0 %v109
    %333 = vmatprep.subr.mxu0 0.0
    %334 = vmatpush1.msra.mxu0 %v110
    %335 = vmatprep.subr.mxu0 0.0
    %336 = vmatpush1.msra.mxu0 %v111
    %337 = vmatprep.subr.mxu0 0.0
    %338 = vmatpush1.msra.mxu0 %v112
    %339 = vmatprep.subr.mxu0 0.0
    %340 = vmatpush1.msra.mxu0 0.0
    %341 = vmatprep.subr.mxu0 0.0
    %342 = vmatpush1.msra.mxu0 0.0
    %343 = vmatprep.subr.mxu0 0.0
    %344 = vmatpush1.msra.mxu0 0.0
    %345 = vmatprep.subr.mxu0 0.0
    %346 = vmatpush1.msra.mxu0 0.0
    %347 = vmatprep.subr.mxu0 0.0
    %348 = vmatpush1.msra.mxu0 0.0
    %349 = vmatprep.subr.mxu0 0.0
    %350 = vmatpush1.msra.mxu0 0.0
    %351 = vmatprep.subr.mxu0 0.0
    %352 = vmatpush1.msra.mxu0 0.0
    %353 = vmatprep.subr.mxu0 0.0
    %354 = vmatpush1.msra.mxu0 0.0
    %355 = vmatprep.subr.mxu0 0.0
    %356 = vmatpush1.msra.mxu0 0.0
    %357 = vmatprep.subr.mxu0 0.0
    %358 = vmatpush1.msra.mxu0 0.0
    %359 = vmatprep.subr.mxu0 0.0
    %360 = vmatpush1.msra.mxu0 0.0
    %361 = vmatprep.subr.mxu0 0.0
    %362 = vmatpush1.msra.mxu0 0.0
    %363 = vmatprep.subr.mxu0 0.0
    %364 = vmatpush1.msra.mxu0 0.0
    %365 = vmatprep.subr.mxu0 0.0
    %366 = vmatpush1.msra.mxu0 0.0
    %367 = vmatprep.subr.mxu0 0.0
    %368 = vmatpush1.msra.mxu0 0.0
    %369 = vmatprep.subr.mxu0 0.0
    %370 = vmatpush1.msra.mxu0 0.0
    %371 = vmatprep.subr.mxu0 0.0
    %372 = vmatpush1.msra.mxu0 0.0
    %373 = vmatprep.subr.mxu0 0.0
    %374 = vmatpush1.msra.mxu0 0.0
    %375 = vmatprep.subr.mxu0 0.0
    %376 = vmatpush1.msra.mxu0 0.0
    %377 = vmatprep.subr.mxu0 0.0
    %378 = vmatpush1.msra.mxu0 0.0
    %379 = vmatprep.subr.mxu0 0.0
    %380 = vmatpush1.msra.mxu0 0.0
    %381 = vmatprep.subr.mxu0 0.0
    %382 = vmatpush1.msra.mxu0 0.0
    %383 = vmatprep.subr.mxu0 0.0
    %384 = vmatpush1.msra.mxu0 0.0
    %385 = vmatprep.subr.mxu0 0.0
    %386 = vmatpush1.msra.mxu0 0.0
    %387 = vmatprep.mubr.f32.mxu0 0.0
    %388 = vmatmul.mubr.f32.gmra.mrb[0].mxu0 %v321
    %v389 = vpop.f32.mrb[0].mxu0
    %v390 = vadd.f32 %v317, %v389
    %v391 = vpop.f32.mrb[0].mxu0
    %392 = vdwg.mxu0
    %v393 = vxor.u32 %v390, 2147483648
    %v394 = vmul.f32 %v393, 1.442695
    %v395 = vpow.pop %v394
    %v396 = vadd.f32 %v395, 1.0
    %v397 = vrcp.pop %v396
    %v398 = vmul.f32 1.0, %v397
    %v399 = vtanh.pop %v390
    %v400 = vmul.f32 %v398, 0.0
    %402 = vrot.lane.b32.xlu0 %v399, 64
    %v403 = vpop.permute.xlu0 %402
    %v405 = vmul.f32 %v398, %v403
    %407 = vrot.lane.b32.xlu0 %v405, 32
    %v408 = vpop.permute.xlu0 %407
    %v410 = vadd.f32 %v400, %v408
    %v411 = vtanh.pop %v410
    %413 = vrot.lane.b32.xlu0 %v411, 64
    %v414 = vpop.permute.xlu0 %413
    %v416 = vmul.f32 %v398, %v414
    %v417 = vsel %vm114, %v310, 0
    %419 = vmatprep.subr.mxu0 0.0
    %420 = vmatpush1.msra.mxu0 %v101
    %421 = vmatprep.subr.mxu0 0.0
    %422 = vmatpush1.msra.mxu0 %v102
    %423 = vmatprep.subr.mxu0 0.0
    %424 = vmatpush1.msra.mxu0 %v103
    %425 = vmatprep.subr.mxu0 0.0
    %426 = vmatpush1.msra.mxu0 %v104
    %427 = vmatprep.subr.mxu0 0.0
    %428 = vmatpush1.msra.mxu0 0.0
    %429 = vmatprep.subr.mxu0 0.0
    %430 = vmatpush1.msra.mxu0 0.0
    %431 = vmatprep.subr.mxu0 0.0
    %432 = vmatpush1.msra.mxu0 0.0
    %433 = vmatprep.subr.mxu0 0.0
    %434 = vmatpush1.msra.mxu0 0.0
    %435 = vmatprep.subr.mxu0 0.0
    %436 = vmatpush1.msra.mxu0 0.0
    %437 = vmatprep.subr.mxu0 0.0
    %438 = vmatpush1.msra.mxu0 0.0
    %439 = vmatprep.subr.mxu0 0.0
    %440 = vmatpush1.msra.mxu0 0.0
    %441 = vmatprep.subr.mxu0 0.0
    %442 = vmatpush1.msra.mxu0 0.0
    %443 = vmatprep.subr.mxu0 0.0
    %444 = vmatpush1.msra.mxu0 0.0
    %445 = vmatprep.subr.mxu0 0.0
    %446 = vmatpush1.msra.mxu0 0.0
    %447 = vmatprep.subr.mxu0 0.0
    %448 = vmatpush1.msra.mxu0 0.0
    %449 = vmatprep.subr.mxu0 0.0
    %450 = vmatpush1.msra.mxu0 0.0
    %451 = vmatprep.subr.mxu0 0.0
    %452 = vmatpush1.msra.mxu0 0.0
    %453 = vmatprep.subr.mxu0 0.0
    %454 = vmatpush1.msra.mxu0 0.0
    %455 = vmatprep.subr.mxu0 0.0
    %456 = vmatpush1.msra.mxu0 0.0
    %457 = vmatprep.subr.mxu0 0.0
    %458 = vmatpush1.msra.mxu0 0.0
    %459 = vmatprep.subr.mxu0 0.0
    %460 = vmatpush1.msra.mxu0 0.0
    %461 = vmatprep.subr.mxu0 0.0
    %462 = vmatpush1.msra.mxu0 0.0
    %463 = vmatprep.subr.mxu0 0.0
    %464 = vmatpush1.msra.mxu0 0.0
    %465 = vmatprep.subr.mxu0 0.0
    %466 = vmatpush1.msra.mxu0 0.0
    %467 = vmatprep.subr.mxu0 0.0
    %468 = vmatpush1.msra.mxu0 0.0
    %469 = vmatprep.subr.mxu0 0.0
    %470 = vmatpush1.msra.mxu0 0.0
    %471 = vmatprep.subr.mxu0 0.0
    %472 = vmatpush1.msra.mxu0 0.0
    %473 = vmatprep.subr.mxu0 0.0
    %474 = vmatpush1.msra.mxu0 0.0
    %475 = vmatprep.subr.mxu0 0.0
    %476 = vmatpush1.msra.mxu0 0.0
    %477 = vmatprep.subr.mxu0 0.0
    %478 = vmatpush1.msra.mxu0 0.0
    %479 = vmatprep.subr.mxu0 0.0
    %480 = vmatpush1.msra.mxu0 0.0
    %481 = vmatprep.subr.mxu0 0.0
    %482 = vmatpush1.msra.mxu0 0.0
    %483 = vmatprep.mubr.f32.mxu0 0.0
    %484 = vmatmul.mubr.f32.gmra.mrb[0].mxu0 %v417
    %v485 = vpop.f32.mrb[0].mxu0
    %v486 = vadd.f32 0.0, %v485
    %v487 = vpop.f32.mrb[0].mxu0
    %488 = vdwg.mxu0
    %v490 = vrot.slane %v486, 7
    %v491 = vrot.slane %v486, 1
    %v492 = vrot.slane %v486, 2
    %v497 = vadd.f32 %v97, %v490
    %v498 = vadd.f32 %v98, %v486
    %v499 = vadd.f32 %v99, %v491
    %v500 = vadd.f32 %v100, %v492
    %v501 = vxor.u32 %v497, 2147483648
    %v502 = vxor.u32 %v498, 2147483648
    %v503 = vxor.u32 %v499, 2147483648
    %v504 = vxor.u32 %v500, 2147483648
    %v505 = vmul.f32 %v501, 1.442695
    %v506 = vpow.pop %v505
    %v507 = vmul.f32 %v502, 1.442695
    %v508 = vpow.pop %v507
    %v509 = vmul.f32 %v503, 1.442695
    %v510 = vpow.pop %v509
    %v511 = vmul.f32 %v504, 1.442695
    %v512 = vpow.pop %v511
    %v513 = vadd.f32 %v506, 1.0
    %v514 = vadd.f32 %v508, 1.0
    %v515 = vadd.f32 %v510, 1.0
    %v516 = vadd.f32 %v512, 1.0
    %v517 = vrcp.pop %v513
    %v518 = vmul.f32 1.0, %v517
    %v519 = vrcp.pop %v514
    %v520 = vmul.f32 1.0, %v519
    %v521 = vrcp.pop %v515
    %v522 = vmul.f32 1.0, %v521
    %v523 = vrcp.pop %v516
    %v524 = vmul.f32 1.0, %v523
    %v525 = vtanh.pop %v497
    %v526 = vtanh.pop %v498
    %v527 = vtanh.pop %v499
    %v528 = vtanh.pop %v500
    %v533 = vrot.slane %v268, 7
    %v534 = vrot.slane %v269, 7
    %v535 = vrot.slane %v270, 7
    %v536 = vrot.slane %v271, 7
    %v541 = vmul.f32 %v518, %v533
    %v542 = vmul.f32 %v520, %v534
    %v543 = vmul.f32 %v522, %v535
    %v544 = vmul.f32 %v524, %v536
    %549 = vrot.lane.b32.xlu0 %v525, 64
    %v550 = vpop.permute.xlu0 %549
    %551 = vrot.lane.b32.xlu0 %v526, 64
    %v552 = vpop.permute.xlu0 %551
    %553 = vrot.lane.b32.xlu0 %v527, 64
    %v554 = vpop.permute.xlu0 %553
    %555 = vrot.lane.b32.xlu0 %v528, 64
    %v556 = vpop.permute.xlu0 %555
    %v561 = vmul.f32 %v518, %v550
    %v562 = vmul.f32 %v520, %v552
    %v563 = vmul.f32 %v522, %v554
    %v564 = vmul.f32 %v524, %v556
    %569 = vrot.lane.b32.xlu0 %v561, 32
    %v570 = vpop.permute.xlu0 %569
    %571 = vrot.lane.b32.xlu0 %v562, 32
    %v572 = vpop.permute.xlu0 %571
    %573 = vrot.lane.b32.xlu0 %v563, 32
    %v574 = vpop.permute.xlu0 %573
    %575 = vrot.lane.b32.xlu0 %v564, 32
    %v576 = vpop.permute.xlu0 %575
    %v581 = vadd.f32 %v541, %v570
    %v582 = vadd.f32 %v542, %v572
    %v583 = vadd.f32 %v543, %v574
    %v584 = vadd.f32 %v544, %v576
    %v585 = vtanh.pop %v581
    %v586 = vtanh.pop %v582
    %v587 = vtanh.pop %v583
    %v588 = vtanh.pop %v584
    %593 = vrot.lane.b32.xlu0 %v585, 64
    %v594 = vpop.permute.xlu0 %593
    %595 = vrot.lane.b32.xlu0 %v586, 64
    %v596 = vpop.permute.xlu0 %595
    %597 = vrot.lane.b32.xlu0 %v587, 64
    %v598 = vpop.permute.xlu0 %597
    %599 = vrot.lane.b32.xlu0 %v588, 64
    %v600 = vpop.permute.xlu0 %599
    %v605 = vmul.f32 %v518, %v594
    %v606 = vmul.f32 %v520, %v596
    %v607 = vmul.f32 %v522, %v598
    %v608 = vmul.f32 %v524, %v600
    %v613 = vrot.slane %v606, 7
    %v614 = vsel %vm304, %v613, %v605
    %v615 = vrot.slane %v607, 6
    %v616 = vsel %vm307, %v615, %v614
    %v617 = vrot.slane %v608, 5
    %vm618 = vcmask 1044484
    %v619 = vsel %vm618, %v617, %v616
    %620 = vrot.lane.b32.xlu0 %v619, 32
    %v621 = vpop.permute.xlu0 %620
    %v624 = vrot.slane %v416, 7
    %625 = vrot.lane.b32.xlu0 %v624, 64
    %v626 = vpop.permute.xlu0 %625
    %v628 = vsel %vm114, %v621, %v626
    %v630 = vrot.slane %v628, 1
    %v631 = vsel %vm319, %v630, 0
    %633 = vmatprep.subr.mxu0 0.0
    %634 = vmatpush1.msra.mxu0 %v105
    %635 = vmatprep.subr.mxu0 0.0
    %636 = vmatpush1.msra.mxu0 %v106
    %637 = vmatprep.subr.mxu0 0.0
    %638 = vmatpush1.msra.mxu0 %v107
    %639 = vmatprep.subr.mxu0 0.0
    %640 = vmatpush1.msra.mxu0 %v108
    %641 = vmatprep.subr.mxu0 0.0
    %642 = vmatpush1.msra.mxu0 %v109
    %643 = vmatprep.subr.mxu0 0.0
    %644 = vmatpush1.msra.mxu0 %v110
    %645 = vmatprep.subr.mxu0 0.0
    %646 = vmatpush1.msra.mxu0 %v111
    %647 = vmatprep.subr.mxu0 0.0
    %648 = vmatpush1.msra.mxu0 %v112
    %649 = vmatprep.subr.mxu0 0.0
    %650 = vmatpush1.msra.mxu0 0.0
    %651 = vmatprep.subr.mxu0 0.0
    %652 = vmatpush1.msra.mxu0 0.0
    %653 = vmatprep.subr.mxu0 0.0
    %654 = vmatpush1.msra.mxu0 0.0
    %655 = vmatprep.subr.mxu0 0.0
    %656 = vmatpush1.msra.mxu0 0.0
    %657 = vmatprep.subr.mxu0 0.0
    %658 = vmatpush1.msra.mxu0 0.0
    %659 = vmatprep.subr.mxu0 0.0
    %660 = vmatpush1.msra.mxu0 0.0
    %661 = vmatprep.subr.mxu0 0.0
    %662 = vmatpush1.msra.mxu0 0.0
    %663 = vmatprep.subr.mxu0 0.0
    %664 = vmatpush1.msra.mxu0 0.0
    %665 = vmatprep.subr.mxu0 0.0
    %666 = vmatpush1.msra.mxu0 0.0
    %667 = vmatprep.subr.mxu0 0.0
    %668 = vmatpush1.msra.mxu0 0.0
    %669 = vmatprep.subr.mxu0 0.0
    %670 = vmatpush1.msra.mxu0 0.0
    %671 = vmatprep.subr.mxu0 0.0
    %672 = vmatpush1.msra.mxu0 0.0
    %673 = vmatprep.subr.mxu0 0.0
    %674 = vmatpush1.msra.mxu0 0.0
    %675 = vmatprep.subr.mxu0 0.0
    %676 = vmatpush1.msra.mxu0 0.0
    %677 = vmatprep.subr.mxu0 0.0
    %678 = vmatpush1.msra.mxu0 0.0
    %679 = vmatprep.subr.mxu0 0.0
    %680 = vmatpush1.msra.mxu0 0.0
    %681 = vmatprep.subr.mxu0 0.0
    %682 = vmatpush1.msra.mxu0 0.0
    %683 = vmatprep.subr.mxu0 0.0
    %684 = vmatpush1.msra.mxu0 0.0
    %685 = vmatprep.subr.mxu0 0.0
    %686 = vmatpush1.msra.mxu0 0.0
    %687 = vmatprep.subr.mxu0 0.0
    %688 = vmatpush1.msra.mxu0 0.0
    %689 = vmatprep.subr.mxu0 0.0
    %690 = vmatpush1.msra.mxu0 0.0
    %691 = vmatprep.subr.mxu0 0.0
    %692 = vmatpush1.msra.mxu0 0.0
    %693 = vmatprep.subr.mxu0 0.0
    %694 = vmatpush1.msra.mxu0 0.0
    %695 = vmatprep.subr.mxu0 0.0
    %696 = vmatpush1.msra.mxu0 0.0
    %697 = vmatprep.mubr.f32.mxu0 0.0
    %698 = vmatmul.mubr.f32.gmra.mrb[0].mxu0 %v631
    %v699 = vpop.f32.mrb[0].mxu0
    %v700 = vadd.f32 %v317, %v699
    %v701 = vpop.f32.mrb[0].mxu0
    %702 = vdwg.mxu0
    %v703 = vxor.u32 %v700, 2147483648
    %v704 = vmul.f32 %v703, 1.442695
    %v705 = vpow.pop %v704
    %v706 = vadd.f32 %v705, 1.0
    %v707 = vrcp.pop %v706
    %v708 = vmul.f32 1.0, %v707
    %v709 = vtanh.pop %v700
    %v710 = vmul.f32 %v708, %v410
    %712 = vrot.lane.b32.xlu0 %v709, 64
    %v713 = vpop.permute.xlu0 %712
    %v715 = vmul.f32 %v708, %v713
    %717 = vrot.lane.b32.xlu0 %v715, 32
    %v718 = vpop.permute.xlu0 %717
    %v720 = vadd.f32 %v710, %v718
    %v721 = vtanh.pop %v720
    %723 = vrot.lane.b32.xlu0 %v721, 64
    %v724 = vpop.permute.xlu0 %723
    %v726 = vmul.f32 %v708, %v724
    %v727 = vrot.slane %v605, 1
    %v728 = vsel %vm301, %v606, %v727
    %v729 = vrot.slane %v607, 7
    %v730 = vsel %vm304, %v729, %v728
    %v731 = vrot.slane %v608, 6
    %v732 = vsel %vm307, %v731, %v730
    %733 = vrot.lane.b32.xlu0 %v732, 32
    %v734 = vpop.permute.xlu0 %733
    %v735 = vsel %vm114, %v734, 0
    %737 = vmatprep.subr.mxu0 0.0
    %738 = vmatpush1.msra.mxu0 %v101
    %739 = vmatprep.subr.mxu0 0.0
    %740 = vmatpush1.msra.mxu0 %v102
    %741 = vmatprep.subr.mxu0 0.0
    %742 = vmatpush1.msra.mxu0 %v103
    %743 = vmatprep.subr.mxu0 0.0
    %744 = vmatpush1.msra.mxu0 %v104
    %745 = vmatprep.subr.mxu0 0.0
    %746 = vmatpush1.msra.mxu0 0.0
    %747 = vmatprep.subr.mxu0 0.0
    %748 = vmatpush1.msra.mxu0 0.0
    %749 = vmatprep.subr.mxu0 0.0
    %750 = vmatpush1.msra.mxu0 0.0
    %751 = vmatprep.subr.mxu0 0.0
    %752 = vmatpush1.msra.mxu0 0.0
    %753 = vmatprep.subr.mxu0 0.0
    %754 = vmatpush1.msra.mxu0 0.0
    %755 = vmatprep.subr.mxu0 0.0
    %756 = vmatpush1.msra.mxu0 0.0
    %757 = vmatprep.subr.mxu0 0.0
    %758 = vmatpush1.msra.mxu0 0.0
    %759 = vmatprep.subr.mxu0 0.0
    %760 = vmatpush1.msra.mxu0 0.0
    %761 = vmatprep.subr.mxu0 0.0
    %762 = vmatpush1.msra.mxu0 0.0
    %763 = vmatprep.subr.mxu0 0.0
    %764 = vmatpush1.msra.mxu0 0.0
    %765 = vmatprep.subr.mxu0 0.0
    %766 = vmatpush1.msra.mxu0 0.0
    %767 = vmatprep.subr.mxu0 0.0
    %768 = vmatpush1.msra.mxu0 0.0
    %769 = vmatprep.subr.mxu0 0.0
    %770 = vmatpush1.msra.mxu0 0.0
    %771 = vmatprep.subr.mxu0 0.0
    %772 = vmatpush1.msra.mxu0 0.0
    %773 = vmatprep.subr.mxu0 0.0
    %774 = vmatpush1.msra.mxu0 0.0
    %775 = vmatprep.subr.mxu0 0.0
    %776 = vmatpush1.msra.mxu0 0.0
    %777 = vmatprep.subr.mxu0 0.0
    %778 = vmatpush1.msra.mxu0 0.0
    %779 = vmatprep.subr.mxu0 0.0
    %780 = vmatpush1.msra.mxu0 0.0
    %781 = vmatprep.subr.mxu0 0.0
    %782 = vmatpush1.msra.mxu0 0.0
    %783 = vmatprep.subr.mxu0 0.0
    %784 = vmatpush1.msra.mxu0 0.0
    %785 = vmatprep.subr.mxu0 0.0
    %786 = vmatpush1.msra.mxu0 0.0
    %787 = vmatprep.subr.mxu0 0.0
    %788 = vmatpush1.msra.mxu0 0.0
    %789 = vmatprep.subr.mxu0 0.0
    %790 = vmatpush1.msra.mxu0 0.0
    %791 = vmatprep.subr.mxu0 0.0
    %792 = vmatpush1.msra.mxu0 0.0
    %793 = vmatprep.subr.mxu0 0.0
    %794 = vmatpush1.msra.mxu0 0.0
    %795 = vmatprep.subr.mxu0 0.0
    %796 = vmatpush1.msra.mxu0 0.0
    %797 = vmatprep.subr.mxu0 0.0
    %798 = vmatpush1.msra.mxu0 0.0
    %799 = vmatprep.subr.mxu0 0.0
    %800 = vmatpush1.msra.mxu0 0.0
    %801 = vmatprep.mubr.f32.mxu0 0.0
    %802 = vmatmul.mubr.f32.gmra.mrb[0].mxu0 %v735
    %v803 = vpop.f32.mrb[0].mxu0
    %v804 = vadd.f32 0.0, %v803
    %v805 = vpop.f32.mrb[0].mxu0
    %806 = vdwg.mxu0
    %v808 = vrot.slane %v804, 6
    %v809 = vrot.slane %v804, 7
    %v810 = vrot.slane %v804, 1
    %v815 = vadd.f32 %v97, %v808
    %v816 = vadd.f32 %v98, %v809
    %v817 = vadd.f32 %v99, %v804
    %v818 = vadd.f32 %v100, %v810
    %v819 = vxor.u32 %v815, 2147483648
    %v820 = vxor.u32 %v816, 2147483648
    %v821 = vxor.u32 %v817, 2147483648
    %v822 = vxor.u32 %v818, 2147483648
    %v823 = vmul.f32 %v819, 1.442695
    %v824 = vpow.pop %v823
    %v825 = vmul.f32 %v820, 1.442695
    %v826 = vpow.pop %v825
    %v827 = vmul.f32 %v821, 1.442695
    %v828 = vpow.pop %v827
    %v829 = vmul.f32 %v822, 1.442695
    %v830 = vpow.pop %v829
    %v831 = vadd.f32 %v824, 1.0
    %v832 = vadd.f32 %v826, 1.0
    %v833 = vadd.f32 %v828, 1.0
    %v834 = vadd.f32 %v830, 1.0
    %v835 = vrcp.pop %v831
    %v836 = vmul.f32 1.0, %v835
    %v837 = vrcp.pop %v832
    %v838 = vmul.f32 1.0, %v837
    %v839 = vrcp.pop %v833
    %v840 = vmul.f32 1.0, %v839
    %v841 = vrcp.pop %v834
    %v842 = vmul.f32 1.0, %v841
    %v843 = vtanh.pop %v815
    %v844 = vtanh.pop %v816
    %v845 = vtanh.pop %v817
    %v846 = vtanh.pop %v818
    %v851 = vrot.slane %v581, 7
    %v852 = vrot.slane %v582, 7
    %v853 = vrot.slane %v583, 7
    %v854 = vrot.slane %v584, 7
    %v859 = vmul.f32 %v836, %v851
    %v860 = vmul.f32 %v838, %v852
    %v861 = vmul.f32 %v840, %v853
    %v862 = vmul.f32 %v842, %v854
    %867 = vrot.lane.b32.xlu0 %v843, 64
    %v868 = vpop.permute.xlu0 %867
    %869 = vrot.lane.b32.xlu0 %v844, 64
    %v870 = vpop.permute.xlu0 %869
    %871 = vrot.lane.b32.xlu0 %v845, 64
    %v872 = vpop.permute.xlu0 %871
    %873 = vrot.lane.b32.xlu0 %v846, 64
    %v874 = vpop.permute.xlu0 %873
    %v879 = vmul.f32 %v836, %v868
    %v880 = vmul.f32 %v838, %v870
    %v881 = vmul.f32 %v840, %v872
    %v882 = vmul.f32 %v842, %v874
    %887 = vrot.lane.b32.xlu0 %v879, 32
    %v888 = vpop.permute.xlu0 %887
    %889 = vrot.lane.b32.xlu0 %v880, 32
    %v890 = vpop.permute.xlu0 %889
    %891 = vrot.lane.b32.xlu0 %v881, 32
    %v892 = vpop.permute.xlu0 %891
    %893 = vrot.lane.b32.xlu0 %v882, 32
    %v894 = vpop.permute.xlu0 %893
    %v899 = vadd.f32 %v859, %v888
    %v900 = vadd.f32 %v860, %v890
    %v901 = vadd.f32 %v861, %v892
    %v902 = vadd.f32 %v862, %v894
    %v903 = vtanh.pop %v899
    %v904 = vtanh.pop %v900
    %v905 = vtanh.pop %v901
    %v906 = vtanh.pop %v902
    %911 = vrot.lane.b32.xlu0 %v903, 64
    %v912 = vpop.permute.xlu0 %911
    %913 = vrot.lane.b32.xlu0 %v904, 64
    %v914 = vpop.permute.xlu0 %913
    %915 = vrot.lane.b32.xlu0 %v905, 64
    %v916 = vpop.permute.xlu0 %915
    %917 = vrot.lane.b32.xlu0 %v906, 64
    %v918 = vpop.permute.xlu0 %917
    %v923 = vmul.f32 %v836, %v912
    %v924 = vmul.f32 %v838, %v914
    %v925 = vmul.f32 %v840, %v916
    %v926 = vmul.f32 %v842, %v918
    %v931 = vrot.slane %v924, 7
    %v932 = vsel %vm307, %v931, %v923
    %v933 = vrot.slane %v925, 6
    %v934 = vsel %vm618, %v933, %v932
    %v935 = vrot.slane %v926, 5
    %vm936 = vcmask 1045509
    %v937 = vsel %vm936, %v935, %v934
    %938 = vrot.lane.b32.xlu0 %v937, 32
    %v939 = vpop.permute.xlu0 %938
    %v942 = vrot.slane %v726, 6
    %943 = vrot.lane.b32.xlu0 %v942, 64
    %v944 = vpop.permute.xlu0 %943
    %v946 = vsel %vm114, %v939, %v944
    %v948 = vrot.slane %v946, 2
    %v949 = vsel %vm319, %v948, 0
    %951 = vmatprep.subr.mxu0 0.0
    %952 = vmatpush1.msra.mxu0 %v105
    %953 = vmatprep.subr.mxu0 0.0
    %954 = vmatpush1.msra.mxu0 %v106
    %955 = vmatprep.subr.mxu0 0.0
    %956 = vmatpush1.msra.mxu0 %v107
    %957 = vmatprep.subr.mxu0 0.0
    %958 = vmatpush1.msra.mxu0 %v108
    %959 = vmatprep.subr.mxu0 0.0
    %960 = vmatpush1.msra.mxu0 %v109
    %961 = vmatprep.subr.mxu0 0.0
    %962 = vmatpush1.msra.mxu0 %v110
    %963 = vmatprep.subr.mxu0 0.0
    %964 = vmatpush1.msra.mxu0 %v111
    %965 = vmatprep.subr.mxu0 0.0
    %966 = vmatpush1.msra.mxu0 %v112
    %967 = vmatprep.subr.mxu0 0.0
    %968 = vmatpush1.msra.mxu0 0.0
    %969 = vmatprep.subr.mxu0 0.0
    %970 = vmatpush1.msra.mxu0 0.0
    %971 = vmatprep.subr.mxu0 0.0
    %972 = vmatpush1.msra.mxu0 0.0
    %973 = vmatprep.subr.mxu0 0.0
    %974 = vmatpush1.msra.mxu0 0.0
    %975 = vmatprep.subr.mxu0 0.0
    %976 = vmatpush1.msra.mxu0 0.0
    %977 = vmatprep.subr.mxu0 0.0
    %978 = vmatpush1.msra.mxu0 0.0
    %979 = vmatprep.subr.mxu0 0.0
    %980 = vmatpush1.msra.mxu0 0.0
    %981 = vmatprep.subr.mxu0 0.0
    %982 = vmatpush1.msra.mxu0 0.0
    %983 = vmatprep.subr.mxu0 0.0
    %984 = vmatpush1.msra.mxu0 0.0
    %985 = vmatprep.subr.mxu0 0.0
    %986 = vmatpush1.msra.mxu0 0.0
    %987 = vmatprep.subr.mxu0 0.0
    %988 = vmatpush1.msra.mxu0 0.0
    %989 = vmatprep.subr.mxu0 0.0
    %990 = vmatpush1.msra.mxu0 0.0
    %991 = vmatprep.subr.mxu0 0.0
    %992 = vmatpush1.msra.mxu0 0.0
    %993 = vmatprep.subr.mxu0 0.0
    %994 = vmatpush1.msra.mxu0 0.0
    %995 = vmatprep.subr.mxu0 0.0
    %996 = vmatpush1.msra.mxu0 0.0
    %997 = vmatprep.subr.mxu0 0.0
    %998 = vmatpush1.msra.mxu0 0.0
    %999 = vmatprep.subr.mxu0 0.0
    %1000 = vmatpush1.msra.mxu0 0.0
    %1001 = vmatprep.subr.mxu0 0.0
    %1002 = vmatpush1.msra.mxu0 0.0
    %1003 = vmatprep.subr.mxu0 0.0
    %1004 = vmatpush1.msra.mxu0 0.0
    %1005 = vmatprep.subr.mxu0 0.0
    %1006 = vmatpush1.msra.mxu0 0.0
    %1007 = vmatprep.subr.mxu0 0.0
    %1008 = vmatpush1.msra.mxu0 0.0
    %1009 = vmatprep.subr.mxu0 0.0
    %1010 = vmatpush1.msra.mxu0 0.0
    %1011 = vmatprep.subr.mxu0 0.0
    %1012 = vmatpush1.msra.mxu0 0.0
    %1013 = vmatprep.subr.mxu0 0.0
    %1014 = vmatpush1.msra.mxu0 0.0
    %1015 = vmatprep.mubr.f32.mxu0 0.0
    %1016 = vmatmul.mubr.f32.gmra.mrb[0].mxu0 %v949
    %v1017 = vpop.f32.mrb[0].mxu0
    %v1018 = vadd.f32 %v317, %v1017
    %v1019 = vpop.f32.mrb[0].mxu0
    %1020 = vdwg.mxu0
    %v1021 = vxor.u32 %v1018, 2147483648
    %v1022 = vmul.f32 %v1021, 1.442695
    %v1023 = vpow.pop %v1022
    %v1024 = vadd.f32 %v1023, 1.0
    %v1025 = vrcp.pop %v1024
    %v1026 = vmul.f32 1.0, %v1025
    %v1027 = vtanh.pop %v1018
    %v1028 = vmul.f32 %v1026, %v720
    %1030 = vrot.lane.b32.xlu0 %v1027, 64
    %v1031 = vpop.permute.xlu0 %1030
    %v1033 = vmul.f32 %v1026, %v1031
    %1035 = vrot.lane.b32.xlu0 %v1033, 32
    %v1036 = vpop.permute.xlu0 %1035
    %v1038 = vadd.f32 %v1028, %v1036
    %v1039 = vtanh.pop %v1038
    %1041 = vrot.lane.b32.xlu0 %v1039, 64
    %v1042 = vpop.permute.xlu0 %1041
    %v1044 = vmul.f32 %v1026, %v1042
    %v1045 = vrot.slane %v923, 2
    %v1046 = vrot.slane %v924, 1
    %v1047 = vsel %vm301, %v1046, %v1045
    %v1048 = vsel %vm304, %v925, %v1047
    %v1049 = vrot.slane %v926, 7
    %v1050 = vsel %vm307, %v1049, %v1048
    %1051 = vrot.lane.b32.xlu0 %v1050, 32
    %v1052 = vpop.permute.xlu0 %1051
    %v1053 = vsel %vm114, %v1052, 0
    %1055 = vmatprep.subr.mxu0 0.0
    %1056 = vmatpush1.msra.mxu0 %v101
    %1057 = vmatprep.subr.mxu0 0.0
    %1058 = vmatpush1.msra.mxu0 %v102
    %1059 = vmatprep.subr.mxu0 0.0
    %1060 = vmatpush1.msra.mxu0 %v103
    %1061 = vmatprep.subr.mxu0 0.0
    %1062 = vmatpush1.msra.mxu0 %v104
    %1063 = vmatprep.subr.mxu0 0.0
    %1064 = vmatpush1.msra.mxu0 0.0
    %1065 = vmatprep.subr.mxu0 0.0
    %1066 = vmatpush1.msra.mxu0 0.0
    %1067 = vmatprep.subr.mxu0 0.0
    %1068 = vmatpush1.msra.mxu0 0.0
    %1069 = vmatprep.subr.mxu0 0.0
    %1070 = vmatpush1.msra.mxu0 0.0
    %1071 = vmatprep.subr.mxu0 0.0
    %1072 = vmatpush1.msra.mxu0 0.0
    %1073 = vmatprep.subr.mxu0 0.0
    %1074 = vmatpush1.msra.mxu0 0.0
    %1075 = vmatprep.subr.mxu0 0.0
    %1076 = vmatpush1.msra.mxu0 0.0
    %1077 = vmatprep.subr.mxu0 0.0
    %1078 = vmatpush1.msra.mxu0 0.0
    %1079 = vmatprep.subr.mxu0 0.0
    %1080 = vmatpush1.msra.mxu0 0.0
    %1081 = vmatprep.subr.mxu0 0.0
    %1082 = vmatpush1.msra.mxu0 0.0
    %1083 = vmatprep.subr.mxu0 0.0
    %1084 = vmatpush1.msra.mxu0 0.0
    %1085 = vmatprep.subr.mxu0 0.0
    %1086 = vmatpush1.msra.mxu0 0.0
    %1087 = vmatprep.subr.mxu0 0.0
    %1088 = vmatpush1.msra.mxu0 0.0
    %1089 = vmatprep.subr.mxu0 0.0
    %1090 = vmatpush1.msra.mxu0 0.0
    %1091 = vmatprep.subr.mxu0 0.0
    %1092 = vmatpush1.msra.mxu0 0.0
    %1093 = vmatprep.subr.mxu0 0.0
    %1094 = vmatpush1.msra.mxu0 0.0
    %1095 = vmatprep.subr.mxu0 0.0
    %1096 = vmatpush1.msra.mxu0 0.0
    %1097 = vmatprep.subr.mxu0 0.0
    %1098 = vmatpush1.msra.mxu0 0.0
    %1099 = vmatprep.subr.mxu0 0.0
    %1100 = vmatpush1.msra.mxu0 0.0
    %1101 = vmatprep.subr.mxu0 0.0
    %1102 = vmatpush1.msra.mxu0 0.0
    %1103 = vmatprep.subr.mxu0 0.0
    %1104 = vmatpush1.msra.mxu0 0.0
    %1105 = vmatprep.subr.mxu0 0.0
    %1106 = vmatpush1.msra.mxu0 0.0
    %1107 = vmatprep.subr.mxu0 0.0
    %1108 = vmatpush1.msra.mxu0 0.0
    %1109 = vmatprep.subr.mxu0 0.0
    %1110 = vmatpush1.msra.mxu0 0.0
    %1111 = vmatprep.subr.mxu0 0.0
    %1112 = vmatpush1.msra.mxu0 0.0
    %1113 = vmatprep.subr.mxu0 0.0
    %1114 = vmatpush1.msra.mxu0 0.0
    %1115 = vmatprep.subr.mxu0 0.0
    %1116 = vmatpush1.msra.mxu0 0.0
    %1117 = vmatprep.subr.mxu0 0.0
    %1118 = vmatpush1.msra.mxu0 0.0
    %1119 = vmatprep.mubr.f32.mxu0 0.0
    %1120 = vmatmul.mubr.f32.gmra.mrb[0].mxu0 %v1053
    %v1121 = vpop.f32.mrb[0].mxu0
    %v1122 = vadd.f32 0.0, %v1121
    %v1123 = vpop.f32.mrb[0].mxu0
    %1124 = vdwg.mxu0
    %v1126 = vrot.slane %v1122, 5
    %v1127 = vrot.slane %v1122, 6
    %v1128 = vrot.slane %v1122, 7
    %v1133 = vadd.f32 %v97, %v1126
    %v1134 = vadd.f32 %v98, %v1127
    %v1135 = vadd.f32 %v99, %v1128
    %v1136 = vadd.f32 %v100, %v1122
    %v1137 = vxor.u32 %v1133, 2147483648
    %v1138 = vxor.u32 %v1134, 2147483648
    %v1139 = vxor.u32 %v1135, 2147483648
    %v1140 = vxor.u32 %v1136, 2147483648
    %v1141 = vmul.f32 %v1137, 1.442695
    %v1142 = vpow.pop %v1141
    %v1143 = vmul.f32 %v1138, 1.442695
    %v1144 = vpow.pop %v1143
    %v1145 = vmul.f32 %v1139, 1.442695
    %v1146 = vpow.pop %v1145
    %v1147 = vmul.f32 %v1140, 1.442695
    %v1148 = vpow.pop %v1147
    %v1149 = vadd.f32 %v1142, 1.0
    %v1150 = vadd.f32 %v1144, 1.0
    %v1151 = vadd.f32 %v1146, 1.0
    %v1152 = vadd.f32 %v1148, 1.0
    %v1153 = vrcp.pop %v1149
    %v1154 = vmul.f32 1.0, %v1153
    %v1155 = vrcp.pop %v1150
    %v1156 = vmul.f32 1.0, %v1155
    %v1157 = vrcp.pop %v1151
    %v1158 = vmul.f32 1.0, %v1157
    %v1159 = vrcp.pop %v1152
    %v1160 = vmul.f32 1.0, %v1159
    %v1161 = vtanh.pop %v1133
    %v1162 = vtanh.pop %v1134
    %v1163 = vtanh.pop %v1135
    %v1164 = vtanh.pop %v1136
    %v1169 = vrot.slane %v899, 7
    %v1170 = vrot.slane %v900, 7
    %v1171 = vrot.slane %v901, 7
    %v1172 = vrot.slane %v902, 7
    %v1177 = vmul.f32 %v1154, %v1169
    %v1178 = vmul.f32 %v1156, %v1170
    %v1179 = vmul.f32 %v1158, %v1171
    %v1180 = vmul.f32 %v1160, %v1172
    %1185 = vrot.lane.b32.xlu0 %v1161, 64
    %v1186 = vpop.permute.xlu0 %1185
    %1187 = vrot.lane.b32.xlu0 %v1162, 64
    %v1188 = vpop.permute.xlu0 %1187
    %1189 = vrot.lane.b32.xlu0 %v1163, 64
    %v1190 = vpop.permute.xlu0 %1189
    %1191 = vrot.lane.b32.xlu0 %v1164, 64
    %v1192 = vpop.permute.xlu0 %1191
    %v1197 = vmul.f32 %v1154, %v1186
    %v1198 = vmul.f32 %v1156, %v1188
    %v1199 = vmul.f32 %v1158, %v1190
    %v1200 = vmul.f32 %v1160, %v1192
    %1205 = vrot.lane.b32.xlu0 %v1197, 32
    %v1206 = vpop.permute.xlu0 %1205
    %1207 = vrot.lane.b32.xlu0 %v1198, 32
    %v1208 = vpop.permute.xlu0 %1207
    %1209 = vrot.lane.b32.xlu0 %v1199, 32
    %v1210 = vpop.permute.xlu0 %1209
    %1211 = vrot.lane.b32.xlu0 %v1200, 32
    %v1212 = vpop.permute.xlu0 %1211
    %v1217 = vadd.f32 %v1177, %v1206
    %v1218 = vadd.f32 %v1178, %v1208
    %v1219 = vadd.f32 %v1179, %v1210
    %v1220 = vadd.f32 %v1180, %v1212
    %v1221 = vtanh.pop %v1217
    %v1222 = vtanh.pop %v1218
    %v1223 = vtanh.pop %v1219
    %v1224 = vtanh.pop %v1220
    %1229 = vrot.lane.b32.xlu0 %v1221, 64
    %v1230 = vpop.permute.xlu0 %1229
    %1231 = vrot.lane.b32.xlu0 %v1222, 64
    %v1232 = vpop.permute.xlu0 %1231
    %1233 = vrot.lane.b32.xlu0 %v1223, 64
    %v1234 = vpop.permute.xlu0 %1233
    %1235 = vrot.lane.b32.xlu0 %v1224, 64
    %v1236 = vpop.permute.xlu0 %1235
    %v1241 = vmul.f32 %v1154, %v1230
    %v1242 = vmul.f32 %v1156, %v1232
    %v1243 = vmul.f32 %v1158, %v1234
    %v1244 = vmul.f32 %v1160, %v1236
    %v1249 = vrot.slane %v1242, 7
    %v1250 = vsel %vm618, %v1249, %v1241
    %v1251 = vrot.slane %v1243, 6
    %v1252 = vsel %vm936, %v1251, %v1250
    %v1253 = vrot.slane %v1244, 5
    %vm1254 = vcmask 1046534
    %v1255 = vsel %vm1254, %v1253, %v1252
    %1256 = vrot.lane.b32.xlu0 %v1255, 32
    %v1257 = vpop.permute.xlu0 %1256
    %v1260 = vrot.slane %v1044, 5
    %1261 = vrot.lane.b32.xlu0 %v1260, 64
    %v1262 = vpop.permute.xlu0 %1261
    %v1264 = vsel %vm114, %v1257, %v1262
    %v1266 = vrot.slane %v1264, 3
    %v1267 = vsel %vm319, %v1266, 0
    %1269 = vmatprep.subr.mxu0 0.0
    %1270 = vmatpush1.msra.mxu0 %v105
    %1271 = vmatprep.subr.mxu0 0.0
    %1272 = vmatpush1.msra.mxu0 %v106
    %1273 = vmatprep.subr.mxu0 0.0
    %1274 = vmatpush1.msra.mxu0 %v107
    %1275 = vmatprep.subr.mxu0 0.0
    %1276 = vmatpush1.msra.mxu0 %v108
    %1277 = vmatprep.subr.mxu0 0.0
    %1278 = vmatpush1.msra.mxu0 %v109
    %1279 = vmatprep.subr.mxu0 0.0
    %1280 = vmatpush1.msra.mxu0 %v110
    %1281 = vmatprep.subr.mxu0 0.0
    %1282 = vmatpush1.msra.mxu0 %v111
    %1283 = vmatprep.subr.mxu0 0.0
    %1284 = vmatpush1.msra.mxu0 %v112
    %1285 = vmatprep.subr.mxu0 0.0
    %1286 = vmatpush1.msra.mxu0 0.0
    %1287 = vmatprep.subr.mxu0 0.0
    %1288 = vmatpush1.msra.mxu0 0.0
    %1289 = vmatprep.subr.mxu0 0.0
    %1290 = vmatpush1.msra.mxu0 0.0
    %1291 = vmatprep.subr.mxu0 0.0
    %1292 = vmatpush1.msra.mxu0 0.0
    %1293 = vmatprep.subr.mxu0 0.0
    %1294 = vmatpush1.msra.mxu0 0.0
    %1295 = vmatprep.subr.mxu0 0.0
    %1296 = vmatpush1.msra.mxu0 0.0
    %1297 = vmatprep.subr.mxu0 0.0
    %1298 = vmatpush1.msra.mxu0 0.0
    %1299 = vmatprep.subr.mxu0 0.0
    %1300 = vmatpush1.msra.mxu0 0.0
    %1301 = vmatprep.subr.mxu0 0.0
    %1302 = vmatpush1.msra.mxu0 0.0
    %1303 = vmatprep.subr.mxu0 0.0
    %1304 = vmatpush1.msra.mxu0 0.0
    %1305 = vmatprep.subr.mxu0 0.0
    %1306 = vmatpush1.msra.mxu0 0.0
    %1307 = vmatprep.subr.mxu0 0.0
    %1308 = vmatpush1.msra.mxu0 0.0
    %1309 = vmatprep.subr.mxu0 0.0
    %1310 = vmatpush1.msra.mxu0 0.0
    %1311 = vmatprep.subr.mxu0 0.0
    %1312 = vmatpush1.msra.mxu0 0.0
    %1313 = vmatprep.subr.mxu0 0.0
    %1314 = vmatpush1.msra.mxu0 0.0
    %1315 = vmatprep.subr.mxu0 0.0
    %1316 = vmatpush1.msra.mxu0 0.0
    %1317 = vmatprep.subr.mxu0 0.0
    %1318 = vmatpush1.msra.mxu0 0.0
    %1319 = vmatprep.subr.mxu0 0.0
    %1320 = vmatpush1.msra.mxu0 0.0
    %1321 = vmatprep.subr.mxu0 0.0
    %1322 = vmatpush1.msra.mxu0 0.0
    %1323 = vmatprep.subr.mxu0 0.0
    %1324 = vmatpush1.msra.mxu0 0.0
    %1325 = vmatprep.subr.mxu0 0.0
    %1326 = vmatpush1.msra.mxu0 0.0
    %1327 = vmatprep.subr.mxu0 0.0
    %1328 = vmatpush1.msra.mxu0 0.0
    %1329 = vmatprep.subr.mxu0 0.0
    %1330 = vmatpush1.msra.mxu0 0.0
    %1331 = vmatprep.subr.mxu0 0.0
    %1332 = vmatpush1.msra.mxu0 0.0
    %1333 = vmatprep.mubr.f32.mxu0 0.0
    %1334 = vmatmul.mubr.f32.gmra.mrb[0].mxu0 %v1267
    %v1335 = vpop.f32.mrb[0].mxu0
    %v1336 = vadd.f32 %v317, %v1335
    %v1337 = vpop.f32.mrb[0].mxu0
    %1338 = vdwg.mxu0
    %v1339 = vxor.u32 %v1336, 2147483648
    %v1340 = vmul.f32 %v1339, 1.442695
    %v1341 = vpow.pop %v1340
    %v1342 = vadd.f32 %v1341, 1.0
    %v1343 = vrcp.pop %v1342
    %v1344 = vmul.f32 1.0, %v1343
    %v1345 = vtanh.pop %v1336
    %v1346 = vmul.f32 %v1344, %v1038
    %1348 = vrot.lane.b32.xlu0 %v1345, 64
    %v1349 = vpop.permute.xlu0 %1348
    %v1351 = vmul.f32 %v1344, %v1349
    %1353 = vrot.lane.b32.xlu0 %v1351, 32
    %v1354 = vpop.permute.xlu0 %1353
    %v1356 = vadd.f32 %v1346, %v1354
    %v1357 = vtanh.pop %v1356
    %1359 = vrot.lane.b32.xlu0 %v1357, 64
    %v1360 = vpop.permute.xlu0 %1359
    %v1362 = vmul.f32 %v1344, %v1360
    %v1363 = vrot.slane %v1241, 3
    %v1364 = vrot.slane %v1242, 2
    %v1365 = vsel %vm301, %v1364, %v1363
    %v1366 = vrot.slane %v1243, 1
    %v1367 = vsel %vm304, %v1366, %v1365
    %v1368 = vsel %vm307, %v1244, %v1367
    %1369 = vrot.lane.b32.xlu0 %v1368, 32
    %v1370 = vpop.permute.xlu0 %1369
    %v1371 = vsel %vm114, %v1370, 0
    %1373 = vmatprep.subr.mxu0 0.0
    %1374 = vmatpush1.msra.mxu0 %v101
    %1375 = vmatprep.subr.mxu0 0.0
    %1376 = vmatpush1.msra.mxu0 %v102
    %1377 = vmatprep.subr.mxu0 0.0
    %1378 = vmatpush1.msra.mxu0 %v103
    %1379 = vmatprep.subr.mxu0 0.0
    %1380 = vmatpush1.msra.mxu0 %v104
    %1381 = vmatprep.subr.mxu0 0.0
    %1382 = vmatpush1.msra.mxu0 0.0
    %1383 = vmatprep.subr.mxu0 0.0
    %1384 = vmatpush1.msra.mxu0 0.0
    %1385 = vmatprep.subr.mxu0 0.0
    %1386 = vmatpush1.msra.mxu0 0.0
    %1387 = vmatprep.subr.mxu0 0.0
    %1388 = vmatpush1.msra.mxu0 0.0
    %1389 = vmatprep.subr.mxu0 0.0
    %1390 = vmatpush1.msra.mxu0 0.0
    %1391 = vmatprep.subr.mxu0 0.0
    %1392 = vmatpush1.msra.mxu0 0.0
    %1393 = vmatprep.subr.mxu0 0.0
    %1394 = vmatpush1.msra.mxu0 0.0
    %1395 = vmatprep.subr.mxu0 0.0
    %1396 = vmatpush1.msra.mxu0 0.0
    %1397 = vmatprep.subr.mxu0 0.0
    %1398 = vmatpush1.msra.mxu0 0.0
    %1399 = vmatprep.subr.mxu0 0.0
    %1400 = vmatpush1.msra.mxu0 0.0
    %1401 = vmatprep.subr.mxu0 0.0
    %1402 = vmatpush1.msra.mxu0 0.0
    %1403 = vmatprep.subr.mxu0 0.0
    %1404 = vmatpush1.msra.mxu0 0.0
    %1405 = vmatprep.subr.mxu0 0.0
    %1406 = vmatpush1.msra.mxu0 0.0
    %1407 = vmatprep.subr.mxu0 0.0
    %1408 = vmatpush1.msra.mxu0 0.0
    %1409 = vmatprep.subr.mxu0 0.0
    %1410 = vmatpush1.msra.mxu0 0.0
    %1411 = vmatprep.subr.mxu0 0.0
    %1412 = vmatpush1.msra.mxu0 0.0
    %1413 = vmatprep.subr.mxu0 0.0
    %1414 = vmatpush1.msra.mxu0 0.0
    %1415 = vmatprep.subr.mxu0 0.0
    %1416 = vmatpush1.msra.mxu0 0.0
    %1417 = vmatprep.subr.mxu0 0.0
    %1418 = vmatpush1.msra.mxu0 0.0
    %1419 = vmatprep.subr.mxu0 0.0
    %1420 = vmatpush1.msra.mxu0 0.0
    %1421 = vmatprep.subr.mxu0 0.0
    %1422 = vmatpush1.msra.mxu0 0.0
    %1423 = vmatprep.subr.mxu0 0.0
    %1424 = vmatpush1.msra.mxu0 0.0
    %1425 = vmatprep.subr.mxu0 0.0
    %1426 = vmatpush1.msra.mxu0 0.0
    %1427 = vmatprep.subr.mxu0 0.0
    %1428 = vmatpush1.msra.mxu0 0.0
    %1429 = vmatprep.subr.mxu0 0.0
    %1430 = vmatpush1.msra.mxu0 0.0
    %1431 = vmatprep.subr.mxu0 0.0
    %1432 = vmatpush1.msra.mxu0 0.0
    %1433 = vmatprep.subr.mxu0 0.0
    %1434 = vmatpush1.msra.mxu0 0.0
    %1435 = vmatprep.subr.mxu0 0.0
    %1436 = vmatpush1.msra.mxu0 0.0
    %1437 = vmatprep.mubr.f32.mxu0 0.0
    %1438 = vmatmul.mubr.f32.gmra.mrb[0].mxu0 %v1371
    %v1439 = vpop.f32.mrb[0].mxu0
    %v1440 = vadd.f32 0.0, %v1439
    %v1441 = vpop.f32.mrb[0].mxu0
    %1442 = vdwg.mxu0
    %v1444 = vrot.slane %v1440, 4
    %v1445 = vrot.slane %v1440, 5
    %v1446 = vrot.slane %v1440, 6
    %v1447 = vrot.slane %v1440, 7
    %v1452 = vadd.f32 %v97, %v1444
    %v1453 = vadd.f32 %v98, %v1445
    %v1454 = vadd.f32 %v99, %v1446
    %v1455 = vadd.f32 %v100, %v1447
    %v1456 = vxor.u32 %v1452, 2147483648
    %v1457 = vxor.u32 %v1453, 2147483648
    %v1458 = vxor.u32 %v1454, 2147483648
    %v1459 = vxor.u32 %v1455, 2147483648
    %v1460 = vmul.f32 %v1456, 1.442695
    %v1461 = vpow.pop %v1460
    %v1462 = vmul.f32 %v1457, 1.442695
    %v1463 = vpow.pop %v1462
    %v1464 = vmul.f32 %v1458, 1.442695
    %v1465 = vpow.pop %v1464
    %v1466 = vmul.f32 %v1459, 1.442695
    %v1467 = vpow.pop %v1466
    %v1468 = vadd.f32 %v1461, 1.0
    %v1469 = vadd.f32 %v1463, 1.0
    %v1470 = vadd.f32 %v1465, 1.0
    %v1471 = vadd.f32 %v1467, 1.0
    %v1472 = vrcp.pop %v1468
    %v1473 = vmul.f32 1.0, %v1472
    %v1474 = vrcp.pop %v1469
    %v1475 = vmul.f32 1.0, %v1474
    %v1476 = vrcp.pop %v1470
    %v1477 = vmul.f32 1.0, %v1476
    %v1478 = vrcp.pop %v1471
    %v1479 = vmul.f32 1.0, %v1478
    %v1480 = vtanh.pop %v1452
    %v1481 = vtanh.pop %v1453
    %v1482 = vtanh.pop %v1454
    %v1483 = vtanh.pop %v1455
    %v1488 = vrot.slane %v1217, 7
    %v1489 = vrot.slane %v1218, 7
    %v1490 = vrot.slane %v1219, 7
    %v1491 = vrot.slane %v1220, 7
    %v1496 = vmul.f32 %v1473, %v1488
    %v1497 = vmul.f32 %v1475, %v1489
    %v1498 = vmul.f32 %v1477, %v1490
    %v1499 = vmul.f32 %v1479, %v1491
    %1504 = vrot.lane.b32.xlu0 %v1480, 64
    %v1505 = vpop.permute.xlu0 %1504
    %1506 = vrot.lane.b32.xlu0 %v1481, 64
    %v1507 = vpop.permute.xlu0 %1506
    %1508 = vrot.lane.b32.xlu0 %v1482, 64
    %v1509 = vpop.permute.xlu0 %1508
    %1510 = vrot.lane.b32.xlu0 %v1483, 64
    %v1511 = vpop.permute.xlu0 %1510
    %v1516 = vmul.f32 %v1473, %v1505
    %v1517 = vmul.f32 %v1475, %v1507
    %v1518 = vmul.f32 %v1477, %v1509
    %v1519 = vmul.f32 %v1479, %v1511
    %1524 = vrot.lane.b32.xlu0 %v1516, 32
    %v1525 = vpop.permute.xlu0 %1524
    %1526 = vrot.lane.b32.xlu0 %v1517, 32
    %v1527 = vpop.permute.xlu0 %1526
    %1528 = vrot.lane.b32.xlu0 %v1518, 32
    %v1529 = vpop.permute.xlu0 %1528
    %1530 = vrot.lane.b32.xlu0 %v1519, 32
    %v1531 = vpop.permute.xlu0 %1530
    %v1536 = vadd.f32 %v1496, %v1525
    %v1537 = vadd.f32 %v1497, %v1527
    %v1538 = vadd.f32 %v1498, %v1529
    %v1539 = vadd.f32 %v1499, %v1531
    %v1540 = vtanh.pop %v1536
    %v1541 = vtanh.pop %v1537
    %v1542 = vtanh.pop %v1538
    %v1543 = vtanh.pop %v1539
    %1548 = vrot.lane.b32.xlu0 %v1540, 64
    %v1549 = vpop.permute.xlu0 %1548
    %1550 = vrot.lane.b32.xlu0 %v1541, 64
    %v1551 = vpop.permute.xlu0 %1550
    %1552 = vrot.lane.b32.xlu0 %v1542, 64
    %v1553 = vpop.permute.xlu0 %1552
    %1554 = vrot.lane.b32.xlu0 %v1543, 64
    %v1555 = vpop.permute.xlu0 %1554
    %v1560 = vmul.f32 %v1473, %v1549
    %v1561 = vmul.f32 %v1475, %v1551
    %v1562 = vmul.f32 %v1477, %v1553
    %v1563 = vmul.f32 %v1479, %v1555
    %v1568 = vrot.slane %v1561, 7
    %v1569 = vsel %vm936, %v1568, %v1560
    %v1570 = vrot.slane %v1562, 6
    %v1571 = vsel %vm1254, %v1570, %v1569
    %v1572 = vrot.slane %v1563, 5
    %vm1573 = vcmask 1047559
    %v1574 = vsel %vm1573, %v1572, %v1571
    %1575 = vrot.lane.b32.xlu0 %v1574, 32
    %v1576 = vpop.permute.xlu0 %1575
    %v1579 = vrot.slane %v1362, 4
    %1580 = vrot.lane.b32.xlu0 %v1579, 64
    %v1581 = vpop.permute.xlu0 %1580
    %v1583 = vsel %vm114, %v1576, %v1581
    %v1585 = vrot.slane %v1583, 4
    %v1586 = vsel %vm319, %v1585, 0
    %1588 = vmatprep.subr.mxu0 0.0
    %1589 = vmatpush1.msra.mxu0 %v105
    %1590 = vmatprep.subr.mxu0 0.0
    %1591 = vmatpush1.msra.mxu0 %v106
    %1592 = vmatprep.subr.mxu0 0.0
    %1593 = vmatpush1.msra.mxu0 %v107
    %1594 = vmatprep.subr.mxu0 0.0
    %1595 = vmatpush1.msra.mxu0 %v108
    %1596 = vmatprep.subr.mxu0 0.0
    %1597 = vmatpush1.msra.mxu0 %v109
    %1598 = vmatprep.subr.mxu0 0.0
    %1599 = vmatpush1.msra.mxu0 %v110
    %1600 = vmatprep.subr.mxu0 0.0
    %1601 = vmatpush1.msra.mxu0 %v111
    %1602 = vmatprep.subr.mxu0 0.0
    %1603 = vmatpush1.msra.mxu0 %v112
    %1604 = vmatprep.subr.mxu0 0.0
    %1605 = vmatpush1.msra.mxu0 0.0
    %1606 = vmatprep.subr.mxu0 0.0
    %1607 = vmatpush1.msra.mxu0 0.0
    %1608 = vmatprep.subr.mxu0 0.0
    %1609 = vmatpush1.msra.mxu0 0.0
    %1610 = vmatprep.subr.mxu0 0.0
    %1611 = vmatpush1.msra.mxu0 0.0
    %1612 = vmatprep.subr.mxu0 0.0
    %1613 = vmatpush1.msra.mxu0 0.0
    %1614 = vmatprep.subr.mxu0 0.0
    %1615 = vmatpush1.msra.mxu0 0.0
    %1616 = vmatprep.subr.mxu0 0.0
    %1617 = vmatpush1.msra.mxu0 0.0
    %1618 = vmatprep.subr.mxu0 0.0
    %1619 = vmatpush1.msra.mxu0 0.0
    %1620 = vmatprep.subr.mxu0 0.0
    %1621 = vmatpush1.msra.mxu0 0.0
    %1622 = vmatprep.subr.mxu0 0.0
    %1623 = vmatpush1.msra.mxu0 0.0
    %1624 = vmatprep.subr.mxu0 0.0
    %1625 = vmatpush1.msra.mxu0 0.0
    %1626 = vmatprep.subr.mxu0 0.0
    %1627 = vmatpush1.msra.mxu0 0.0
    %1628 = vmatprep.subr.mxu0 0.0
    %1629 = vmatpush1.msra.mxu0 0.0
    %1630 = vmatprep.subr.mxu0 0.0
    %1631 = vmatpush1.msra.mxu0 0.0
    %1632 = vmatprep.subr.mxu0 0.0
    %1633 = vmatpush1.msra.mxu0 0.0
    %1634 = vmatprep.subr.mxu0 0.0
    %1635 = vmatpush1.msra.mxu0 0.0
    %1636 = vmatprep.subr.mxu0 0.0
    %1637 = vmatpush1.msra.mxu0 0.0
    %1638 = vmatprep.subr.mxu0 0.0
    %1639 = vmatpush1.msra.mxu0 0.0
    %1640 = vmatprep.subr.mxu0 0.0
    %1641 = vmatpush1.msra.mxu0 0.0
    %1642 = vmatprep.subr.mxu0 0.0
    %1643 = vmatpush1.msra.mxu0 0.0
    %1644 = vmatprep.subr.mxu0 0.0
    %1645 = vmatpush1.msra.mxu0 0.0
    %1646 = vmatprep.subr.mxu0 0.0
    %1647 = vmatpush1.msra.mxu0 0.0
    %1648 = vmatprep.subr.mxu0 0.0
    %1649 = vmatpush1.msra.mxu0 0.0
    %1650 = vmatprep.subr.mxu0 0.0
    %1651 = vmatpush1.msra.mxu0 0.0
    %1652 = vmatprep.mubr.f32.mxu0 0.0
    %1653 = vmatmul.mubr.f32.gmra.mrb[0].mxu0 %v1586
    %v1654 = vpop.f32.mrb[0].mxu0
    %v1655 = vadd.f32 %v317, %v1654
    %v1656 = vpop.f32.mrb[0].mxu0
    %1657 = vdwg.mxu0
    %v1658 = vxor.u32 %v1655, 2147483648
    %v1659 = vmul.f32 %v1658, 1.442695
    %v1660 = vpow.pop %v1659
    %v1661 = vadd.f32 %v1660, 1.0
    %v1662 = vrcp.pop %v1661
    %v1663 = vmul.f32 1.0, %v1662
    %v1664 = vtanh.pop %v1655
    %v1665 = vmul.f32 %v1663, %v1356
    %1667 = vrot.lane.b32.xlu0 %v1664, 64
    %v1668 = vpop.permute.xlu0 %1667
    %v1670 = vmul.f32 %v1663, %v1668
    %1672 = vrot.lane.b32.xlu0 %v1670, 32
    %v1673 = vpop.permute.xlu0 %1672
    %v1675 = vadd.f32 %v1665, %v1673
    %v1676 = vtanh.pop %v1675
    %1678 = vrot.lane.b32.xlu0 %v1676, 64
    %v1679 = vpop.permute.xlu0 %1678
    %v1681 = vmul.f32 %v1663, %v1679
    %v1682 = vrot.slane %v1560, 4
    %v1683 = vrot.slane %v1561, 3
    %v1684 = vsel %vm301, %v1683, %v1682
    %v1685 = vrot.slane %v1562, 2
    %v1686 = vsel %vm304, %v1685, %v1684
    %v1687 = vrot.slane %v1563, 1
    %v1688 = vsel %vm307, %v1687, %v1686
    %1689 = vrot.lane.b32.xlu0 %v1688, 32
    %v1690 = vpop.permute.xlu0 %1689
    %v1691 = vsel %vm114, %v1690, 0
    %1693 = vmatprep.subr.mxu0 0.0
    %1694 = vmatpush1.msra.mxu0 %v101
    %1695 = vmatprep.subr.mxu0 0.0
    %1696 = vmatpush1.msra.mxu0 %v102
    %1697 = vmatprep.subr.mxu0 0.0
    %1698 = vmatpush1.msra.mxu0 %v103
    %1699 = vmatprep.subr.mxu0 0.0
    %1700 = vmatpush1.msra.mxu0 %v104
    %1701 = vmatprep.subr.mxu0 0.0
    %1702 = vmatpush1.msra.mxu0 0.0
    %1703 = vmatprep.subr.mxu0 0.0
    %1704 = vmatpush1.msra.mxu0 0.0
    %1705 = vmatprep.subr.mxu0 0.0
    %1706 = vmatpush1.msra.mxu0 0.0
    %1707 = vmatprep.subr.mxu0 0.0
    %1708 = vmatpush1.msra.mxu0 0.0
    %1709 = vmatprep.subr.mxu0 0.0
    %1710 = vmatpush1.msra.mxu0 0.0
    %1711 = vmatprep.subr.mxu0 0.0
    %1712 = vmatpush1.msra.mxu0 0.0
    %1713 = vmatprep.subr.mxu0 0.0
    %1714 = vmatpush1.msra.mxu0 0.0
    %1715 = vmatprep.subr.mxu0 0.0
    %1716 = vmatpush1.msra.mxu0 0.0
    %1717 = vmatprep.subr.mxu0 0.0
    %1718 = vmatpush1.msra.mxu0 0.0
    %1719 = vmatprep.subr.mxu0 0.0
    %1720 = vmatpush1.msra.mxu0 0.0
    %1721 = vmatprep.subr.mxu0 0.0
    %1722 = vmatpush1.msra.mxu0 0.0
    %1723 = vmatprep.subr.mxu0 0.0
    %1724 = vmatpush1.msra.mxu0 0.0
    %1725 = vmatprep.subr.mxu0 0.0
    %1726 = vmatpush1.msra.mxu0 0.0
    %1727 = vmatprep.subr.mxu0 0.0
    %1728 = vmatpush1.msra.mxu0 0.0
    %1729 = vmatprep.subr.mxu0 0.0
    %1730 = vmatpush1.msra.mxu0 0.0
    %1731 = vmatprep.subr.mxu0 0.0
    %1732 = vmatpush1.msra.mxu0 0.0
    %1733 = vmatprep.subr.mxu0 0.0
    %1734 = vmatpush1.msra.mxu0 0.0
    %1735 = vmatprep.subr.mxu0 0.0
    %1736 = vmatpush1.msra.mxu0 0.0
    %1737 = vmatprep.subr.mxu0 0.0
    %1738 = vmatpush1.msra.mxu0 0.0
    %1739 = vmatprep.subr.mxu0 0.0
    %1740 = vmatpush1.msra.mxu0 0.0
    %1741 = vmatprep.subr.mxu0 0.0
    %1742 = vmatpush1.msra.mxu0 0.0
    %1743 = vmatprep.subr.mxu0 0.0
    %1744 = vmatpush1.msra.mxu0 0.0
    %1745 = vmatprep.subr.mxu0 0.0
    %1746 = vmatpush1.msra.mxu0 0.0
    %1747 = vmatprep.subr.mxu0 0.0
    %1748 = vmatpush1.msra.mxu0 0.0
    %1749 = vmatprep.subr.mxu0 0.0
    %1750 = vmatpush1.msra.mxu0 0.0
    %1751 = vmatprep.subr.mxu0 0.0
    %1752 = vmatpush1.msra.mxu0 0.0
    %1753 = vmatprep.subr.mxu0 0.0
    %1754 = vmatpush1.msra.mxu0 0.0
    %1755 = vmatprep.subr.mxu0 0.0
    %1756 = vmatpush1.msra.mxu0 0.0
    %1757 = vmatprep.mubr.f32.mxu0 0.0
    %1758 = vmatmul.mubr.f32.gmra.mrb[0].mxu0 %v1691
    %v1759 = vpop.f32.mrb[0].mxu0
    %v1760 = vadd.f32 0.0, %v1759
    %v1761 = vpop.f32.mrb[0].mxu0
    %1762 = vdwg.mxu0
    %v1764 = vrot.slane %v1760, 3
    %v1765 = vrot.slane %v1760, 4
    %v1766 = vrot.slane %v1760, 5
    %v1767 = vrot.slane %v1760, 6
    %v1772 = vadd.f32 %v97, %v1764
    %v1773 = vadd.f32 %v98, %v1765
    %v1774 = vadd.f32 %v99, %v1766
    %v1775 = vadd.f32 %v100, %v1767
    %v1776 = vxor.u32 %v1772, 2147483648
    %v1777 = vxor.u32 %v1773, 2147483648
    %v1778 = vxor.u32 %v1774, 2147483648
    %v1779 = vxor.u32 %v1775, 2147483648
    %v1780 = vmul.f32 %v1776, 1.442695
    %v1781 = vpow.pop %v1780
    %v1782 = vmul.f32 %v1777, 1.442695
    %v1783 = vpow.pop %v1782
    %v1784 = vmul.f32 %v1778, 1.442695
    %v1785 = vpow.pop %v1784
    %v1786 = vmul.f32 %v1779, 1.442695
    %v1787 = vpow.pop %v1786
    %v1788 = vadd.f32 %v1781, 1.0
    %v1789 = vadd.f32 %v1783, 1.0
    %v1790 = vadd.f32 %v1785, 1.0
    %v1791 = vadd.f32 %v1787, 1.0
    %v1792 = vrcp.pop %v1788
    %v1793 = vmul.f32 1.0, %v1792
    %v1794 = vrcp.pop %v1789
    %v1795 = vmul.f32 1.0, %v1794
    %v1796 = vrcp.pop %v1790
    %v1797 = vmul.f32 1.0, %v1796
    %v1798 = vrcp.pop %v1791
    %v1799 = vmul.f32 1.0, %v1798
    %v1800 = vtanh.pop %v1772
    %v1801 = vtanh.pop %v1773
    %v1802 = vtanh.pop %v1774
    %v1803 = vtanh.pop %v1775
    %v1808 = vrot.slane %v1536, 7
    %v1809 = vrot.slane %v1537, 7
    %v1810 = vrot.slane %v1538, 7
    %v1811 = vrot.slane %v1539, 7
    %v1816 = vmul.f32 %v1793, %v1808
    %v1817 = vmul.f32 %v1795, %v1809
    %v1818 = vmul.f32 %v1797, %v1810
    %v1819 = vmul.f32 %v1799, %v1811
    %1824 = vrot.lane.b32.xlu0 %v1800, 64
    %v1825 = vpop.permute.xlu0 %1824
    %1826 = vrot.lane.b32.xlu0 %v1801, 64
    %v1827 = vpop.permute.xlu0 %1826
    %1828 = vrot.lane.b32.xlu0 %v1802, 64
    %v1829 = vpop.permute.xlu0 %1828
    %1830 = vrot.lane.b32.xlu0 %v1803, 64
    %v1831 = vpop.permute.xlu0 %1830
    %v1836 = vmul.f32 %v1793, %v1825
    %v1837 = vmul.f32 %v1795, %v1827
    %v1838 = vmul.f32 %v1797, %v1829
    %v1839 = vmul.f32 %v1799, %v1831
    %1844 = vrot.lane.b32.xlu0 %v1836, 32
    %v1845 = vpop.permute.xlu0 %1844
    %1846 = vrot.lane.b32.xlu0 %v1837, 32
    %v1847 = vpop.permute.xlu0 %1846
    %1848 = vrot.lane.b32.xlu0 %v1838, 32
    %v1849 = vpop.permute.xlu0 %1848
    %1850 = vrot.lane.b32.xlu0 %v1839, 32
    %v1851 = vpop.permute.xlu0 %1850
    %v1856 = vadd.f32 %v1816, %v1845
    %v1857 = vadd.f32 %v1817, %v1847
    %v1858 = vadd.f32 %v1818, %v1849
    %v1859 = vadd.f32 %v1819, %v1851
    %v1860 = vtanh.pop %v1856
    %v1861 = vtanh.pop %v1857
    %v1862 = vtanh.pop %v1858
    %v1863 = vtanh.pop %v1859
    %1868 = vrot.lane.b32.xlu0 %v1860, 64
    %v1869 = vpop.permute.xlu0 %1868
    %1870 = vrot.lane.b32.xlu0 %v1861, 64
    %v1871 = vpop.permute.xlu0 %1870
    %1872 = vrot.lane.b32.xlu0 %v1862, 64
    %v1873 = vpop.permute.xlu0 %1872
    %1874 = vrot.lane.b32.xlu0 %v1863, 64
    %v1875 = vpop.permute.xlu0 %1874
    %v1880 = vmul.f32 %v1793, %v1869
    %v1881 = vmul.f32 %v1795, %v1871
    %v1882 = vmul.f32 %v1797, %v1873
    %v1883 = vmul.f32 %v1799, %v1875
    %v1888 = vrot.slane %v1881, 7
    %v1889 = vsel %vm1254, %v1888, %v1880
    %v1890 = vrot.slane %v1882, 6
    %v1891 = vsel %vm1573, %v1890, %v1889
    %v1892 = vrot.slane %v1883, 5
    %1893 = vrot.lane.b32.xlu0 %v1891, 32
    %v1894 = vpop.permute.xlu0 %1893
    %1895 = vrot.lane.b32.xlu0 %v1892, 32
    %v1896 = vpop.permute.xlu0 %1895
    %v1900 = vrot.slane %v1681, 3
    %1901 = vrot.lane.b32.xlu0 %v1900, 64
    %v1902 = vpop.permute.xlu0 %1901
    %v1904 = vsel %vm114, %v1894, %v1902
    %v1905 = vsel %vm114, %v1896, %v1902
    %vm1908 = vcmask 1042432
    %v1909 = vrot.slane %v1904, 5
    %v1910 = vrot.slane %v1905, 5
    %v1911 = vsel %vm1908, %v1909, %v1910
    %v1912 = vsel %vm319, %v1911, 0
    %1914 = vmatprep.subr.mxu0 0.0
    %1915 = vmatpush1.msra.mxu0 %v105
    %1916 = vmatprep.subr.mxu0 0.0
    %1917 = vmatpush1.msra.mxu0 %v106
    %1918 = vmatprep.subr.mxu0 0.0
    %1919 = vmatpush1.msra.mxu0 %v107
    %1920 = vmatprep.subr.mxu0 0.0
    %1921 = vmatpush1.msra.mxu0 %v108
    %1922 = vmatprep.subr.mxu0 0.0
    %1923 = vmatpush1.msra.mxu0 %v109
    %1924 = vmatprep.subr.mxu0 0.0
    %1925 = vmatpush1.msra.mxu0 %v110
    %1926 = vmatprep.subr.mxu0 0.0
    %1927 = vmatpush1.msra.mxu0 %v111
    %1928 = vmatprep.subr.mxu0 0.0
    %1929 = vmatpush1.msra.mxu0 %v112
    %1930 = vmatprep.subr.mxu0 0.0
    %1931 = vmatpush1.msra.mxu0 0.0
    %1932 = vmatprep.subr.mxu0 0.0
    %1933 = vmatpush1.msra.mxu0 0.0
    %1934 = vmatprep.subr.mxu0 0.0
    %1935 = vmatpush1.msra.mxu0 0.0
    %1936 = vmatprep.subr.mxu0 0.0
    %1937 = vmatpush1.msra.mxu0 0.0
    %1938 = vmatprep.subr.mxu0 0.0
    %1939 = vmatpush1.msra.mxu0 0.0
    %1940 = vmatprep.subr.mxu0 0.0
    %1941 = vmatpush1.msra.mxu0 0.0
    %1942 = vmatprep.subr.mxu0 0.0
    %1943 = vmatpush1.msra.mxu0 0.0
    %1944 = vmatprep.subr.mxu0 0.0
    %1945 = vmatpush1.msra.mxu0 0.0
    %1946 = vmatprep.subr.mxu0 0.0
    %1947 = vmatpush1.msra.mxu0 0.0
    %1948 = vmatprep.subr.mxu0 0.0
    %1949 = vmatpush1.msra.mxu0 0.0
    %1950 = vmatprep.subr.mxu0 0.0
    %1951 = vmatpush1.msra.mxu0 0.0
    %1952 = vmatprep.subr.mxu0 0.0
    %1953 = vmatpush1.msra.mxu0 0.0
    %1954 = vmatprep.subr.mxu0 0.0
    %1955 = vmatpush1.msra.mxu0 0.0
    %1956 = vmatprep.subr.mxu0 0.0
    %1957 = vmatpush1.msra.mxu0 0.0
    %1958 = vmatprep.subr.mxu0 0.0
    %1959 = vmatpush1.msra.mxu0 0.0
    %1960 = vmatprep.subr.mxu0 0.0
    %1961 = vmatpush1.msra.mxu0 0.0
    %1962 = vmatprep.subr.mxu0 0.0
    %1963 = vmatpush1.msra.mxu0 0.0
    %1964 = vmatprep.subr.mxu0 0.0
    %1965 = vmatpush1.msra.mxu0 0.0
    %1966 = vmatprep.subr.mxu0 0.0
    %1967 = vmatpush1.msra.mxu0 0.0
    %1968 = vmatprep.subr.mxu0 0.0
    %1969 = vmatpush1.msra.mxu0 0.0
    %1970 = vmatprep.subr.mxu0 0.0
    %1971 = vmatpush1.msra.mxu0 0.0
    %1972 = vmatprep.subr.mxu0 0.0
    %1973 = vmatpush1.msra.mxu0 0.0
    %1974 = vmatprep.subr.mxu0 0.0
    %1975 = vmatpush1.msra.mxu0 0.0
    %1976 = vmatprep.subr.mxu0 0.0
    %1977 = vmatpush1.msra.mxu0 0.0
    %1978 = vmatprep.mubr.f32.mxu0 0.0
    %1979 = vmatmul.mubr.f32.gmra.mrb[0].mxu0 %v1912
    %v1980 = vpop.f32.mrb[0].mxu0
    %v1981 = vadd.f32 %v317, %v1980
    %v1982 = vpop.f32.mrb[0].mxu0
    %1983 = vdwg.mxu0
    %v1984 = vxor.u32 %v1981, 2147483648
    %v1985 = vmul.f32 %v1984, 1.442695
    %v1986 = vpow.pop %v1985
    %v1987 = vadd.f32 %v1986, 1.0
    %v1988 = vrcp.pop %v1987
    %v1989 = vmul.f32 1.0, %v1988
    %v1990 = vtanh.pop %v1981
    %v1991 = vmul.f32 %v1989, %v1675
    %1993 = vrot.lane.b32.xlu0 %v1990, 64
    %v1994 = vpop.permute.xlu0 %1993
    %v1996 = vmul.f32 %v1989, %v1994
    %1998 = vrot.lane.b32.xlu0 %v1996, 32
    %v1999 = vpop.permute.xlu0 %1998
    %v2001 = vadd.f32 %v1991, %v1999
    %v2002 = vtanh.pop %v2001
    %2004 = vrot.lane.b32.xlu0 %v2002, 64
    %v2005 = vpop.permute.xlu0 %2004
    %v2007 = vmul.f32 %v1989, %v2005
    %v2008 = vrot.slane %v1880, 5
    %v2009 = vrot.slane %v1881, 4
    %v2010 = vsel %vm301, %v2009, %v2008
    %v2011 = vrot.slane %v1882, 3
    %v2012 = vsel %vm304, %v2011, %v2010
    %v2013 = vrot.slane %v1883, 2
    %v2014 = vsel %vm307, %v2013, %v2012
    %2015 = vrot.lane.b32.xlu0 %v2014, 32
    %v2016 = vpop.permute.xlu0 %2015
    %v2017 = vsel %vm114, %v2016, 0
    %2019 = vmatprep.subr.mxu0 0.0
    %2020 = vmatpush1.msra.mxu0 %v101
    %2021 = vmatprep.subr.mxu0 0.0
    %2022 = vmatpush1.msra.mxu0 %v102
    %2023 = vmatprep.subr.mxu0 0.0
    %2024 = vmatpush1.msra.mxu0 %v103
    %2025 = vmatprep.subr.mxu0 0.0
    %2026 = vmatpush1.msra.mxu0 %v104
    %2027 = vmatprep.subr.mxu0 0.0
    %2028 = vmatpush1.msra.mxu0 0.0
    %2029 = vmatprep.subr.mxu0 0.0
    %2030 = vmatpush1.msra.mxu0 0.0
    %2031 = vmatprep.subr.mxu0 0.0
    %2032 = vmatpush1.msra.mxu0 0.0
    %2033 = vmatprep.subr.mxu0 0.0
    %2034 = vmatpush1.msra.mxu0 0.0
    %2035 = vmatprep.subr.mxu0 0.0
    %2036 = vmatpush1.msra.mxu0 0.0
    %2037 = vmatprep.subr.mxu0 0.0
    %2038 = vmatpush1.msra.mxu0 0.0
    %2039 = vmatprep.subr.mxu0 0.0
    %2040 = vmatpush1.msra.mxu0 0.0
    %2041 = vmatprep.subr.mxu0 0.0
    %2042 = vmatpush1.msra.mxu0 0.0
    %2043 = vmatprep.subr.mxu0 0.0
    %2044 = vmatpush1.msra.mxu0 0.0
    %2045 = vmatprep.subr.mxu0 0.0
    %2046 = vmatpush1.msra.mxu0 0.0
    %2047 = vmatprep.subr.mxu0 0.0
    %2048 = vmatpush1.msra.mxu0 0.0
    %2049 = vmatprep.subr.mxu0 0.0
    %2050 = vmatpush1.msra.mxu0 0.0
    %2051 = vmatprep.subr.mxu0 0.0
    %2052 = vmatpush1.msra.mxu0 0.0
    %2053 = vmatprep.subr.mxu0 0.0
    %2054 = vmatpush1.msra.mxu0 0.0
    %2055 = vmatprep.subr.mxu0 0.0
    %2056 = vmatpush1.msra.mxu0 0.0
    %2057 = vmatprep.subr.mxu0 0.0
    %2058 = vmatpush1.msra.mxu0 0.0
    %2059 = vmatprep.subr.mxu0 0.0
    %2060 = vmatpush1.msra.mxu0 0.0
    %2061 = vmatprep.subr.mxu0 0.0
    %2062 = vmatpush1.msra.mxu0 0.0
    %2063 = vmatprep.subr.mxu0 0.0
    %2064 = vmatpush1.msra.mxu0 0.0
    %2065 = vmatprep.subr.mxu0 0.0
    %2066 = vmatpush1.msra.mxu0 0.0
    %2067 = vmatprep.subr.mxu0 0.0
    %2068 = vmatpush1.msra.mxu0 0.0
    %2069 = vmatprep.subr.mxu0 0.0
    %2070 = vmatpush1.msra.mxu0 0.0
    %2071 = vmatprep.subr.mxu0 0.0
    %2072 = vmatpush1.msra.mxu0 0.0
    %2073 = vmatprep.subr.mxu0 0.0
    %2074 = vmatpush1.msra.mxu0 0.0
    %2075 = vmatprep.subr.mxu0 0.0
    %2076 = vmatpush1.msra.mxu0 0.0
    %2077 = vmatprep.subr.mxu0 0.0
    %2078 = vmatpush1.msra.mxu0 0.0
    %2079 = vmatprep.subr.mxu0 0.0
    %2080 = vmatpush1.msra.mxu0 0.0
    %2081 = vmatprep.subr.mxu0 0.0
    %2082 = vmatpush1.msra.mxu0 0.0
    %2083 = vmatprep.mubr.f32.mxu0 0.0
    %2084 = vmatmul.mubr.f32.gmra.mrb[0].mxu0 %v2017
    %v2085 = vpop.f32.mrb[0].mxu0
    %v2086 = vadd.f32 0.0, %v2085
    %v2087 = vpop.f32.mrb[0].mxu0
    %2088 = vdwg.mxu0
    %v2090 = vrot.slane %v2086, 2
    %v2091 = vrot.slane %v2086, 3
    %v2092 = vrot.slane %v2086, 4
    %v2093 = vrot.slane %v2086, 5
    %v2098 = vadd.f32 %v97, %v2090
    %v2099 = vadd.f32 %v98, %v2091
    %v2100 = vadd.f32 %v99, %v2092
    %v2101 = vadd.f32 %v100, %v2093
    %v2102 = vxor.u32 %v2098, 2147483648
    %v2103 = vxor.u32 %v2099, 2147483648
    %v2104 = vxor.u32 %v2100, 2147483648
    %v2105 = vxor.u32 %v2101, 2147483648
    %v2106 = vmul.f32 %v2102, 1.442695
    %v2107 = vpow.pop %v2106
    %v2108 = vmul.f32 %v2103, 1.442695
    %v2109 = vpow.pop %v2108
    %v2110 = vmul.f32 %v2104, 1.442695
    %v2111 = vpow.pop %v2110
    %v2112 = vmul.f32 %v2105, 1.442695
    %v2113 = vpow.pop %v2112
    %v2114 = vadd.f32 %v2107, 1.0
    %v2115 = vadd.f32 %v2109, 1.0
    %v2116 = vadd.f32 %v2111, 1.0
    %v2117 = vadd.f32 %v2113, 1.0
    %v2118 = vrcp.pop %v2114
    %v2119 = vmul.f32 1.0, %v2118
    %v2120 = vrcp.pop %v2115
    %v2121 = vmul.f32 1.0, %v2120
    %v2122 = vrcp.pop %v2116
    %v2123 = vmul.f32 1.0, %v2122
    %v2124 = vrcp.pop %v2117
    %v2125 = vmul.f32 1.0, %v2124
    %v2126 = vtanh.pop %v2098
    %v2127 = vtanh.pop %v2099
    %v2128 = vtanh.pop %v2100
    %v2129 = vtanh.pop %v2101
    %v2134 = vrot.slane %v1856, 7
    %v2135 = vrot.slane %v1857, 7
    %v2136 = vrot.slane %v1858, 7
    %v2137 = vrot.slane %v1859, 7
    %v2142 = vmul.f32 %v2119, %v2134
    %v2143 = vmul.f32 %v2121, %v2135
    %v2144 = vmul.f32 %v2123, %v2136
    %v2145 = vmul.f32 %v2125, %v2137
    %2150 = vrot.lane.b32.xlu0 %v2126, 64
    %v2151 = vpop.permute.xlu0 %2150
    %2152 = vrot.lane.b32.xlu0 %v2127, 64
    %v2153 = vpop.permute.xlu0 %2152
    %2154 = vrot.lane.b32.xlu0 %v2128, 64
    %v2155 = vpop.permute.xlu0 %2154
    %2156 = vrot.lane.b32.xlu0 %v2129, 64
    %v2157 = vpop.permute.xlu0 %2156
    %v2162 = vmul.f32 %v2119, %v2151
    %v2163 = vmul.f32 %v2121, %v2153
    %v2164 = vmul.f32 %v2123, %v2155
    %v2165 = vmul.f32 %v2125, %v2157
    %2170 = vrot.lane.b32.xlu0 %v2162, 32
    %v2171 = vpop.permute.xlu0 %2170
    %2172 = vrot.lane.b32.xlu0 %v2163, 32
    %v2173 = vpop.permute.xlu0 %2172
    %2174 = vrot.lane.b32.xlu0 %v2164, 32
    %v2175 = vpop.permute.xlu0 %2174
    %2176 = vrot.lane.b32.xlu0 %v2165, 32
    %v2177 = vpop.permute.xlu0 %2176
    %v2182 = vadd.f32 %v2142, %v2171
    %v2183 = vadd.f32 %v2143, %v2173
    %v2184 = vadd.f32 %v2144, %v2175
    %v2185 = vadd.f32 %v2145, %v2177
    %v2186 = vtanh.pop %v2182
    %v2187 = vtanh.pop %v2183
    %v2188 = vtanh.pop %v2184
    %v2189 = vtanh.pop %v2185
    %2194 = vrot.lane.b32.xlu0 %v2186, 64
    %v2195 = vpop.permute.xlu0 %2194
    %2196 = vrot.lane.b32.xlu0 %v2187, 64
    %v2197 = vpop.permute.xlu0 %2196
    %2198 = vrot.lane.b32.xlu0 %v2188, 64
    %v2199 = vpop.permute.xlu0 %2198
    %2200 = vrot.lane.b32.xlu0 %v2189, 64
    %v2201 = vpop.permute.xlu0 %2200
    %v2206 = vmul.f32 %v2119, %v2195
    %v2207 = vmul.f32 %v2121, %v2197
    %v2208 = vmul.f32 %v2123, %v2199
    %v2209 = vmul.f32 %v2125, %v2201
    %v2214 = vrot.slane %v2207, 7
    %v2215 = vsel %vm1573, %v2214, %v2206
    %v2216 = vrot.slane %v2208, 6
    %v2217 = vrot.slane %v2209, 5
    %v2218 = vsel %vm301, %v2217, %v2216
    %2219 = vrot.lane.b32.xlu0 %v2215, 32
    %v2220 = vpop.permute.xlu0 %2219
    %2221 = vrot.lane.b32.xlu0 %v2218, 32
    %v2222 = vpop.permute.xlu0 %2221
    %v2226 = vrot.slane %v2007, 2
    %2227 = vrot.lane.b32.xlu0 %v2226, 64
    %v2228 = vpop.permute.xlu0 %2227
    %v2230 = vsel %vm114, %v2220, %v2228
    %v2231 = vsel %vm114, %v2222, %v2228
    %vm2234 = vcmask 1041408
    %v2235 = vrot.slane %v2230, 6
    %v2236 = vrot.slane %v2231, 6
    %v2237 = vsel %vm2234, %v2235, %v2236
    %v2238 = vsel %vm319, %v2237, 0
    %2240 = vmatprep.subr.mxu0 0.0
    %2241 = vmatpush1.msra.mxu0 %v105
    %2242 = vmatprep.subr.mxu0 0.0
    %2243 = vmatpush1.msra.mxu0 %v106
    %2244 = vmatprep.subr.mxu0 0.0
    %2245 = vmatpush1.msra.mxu0 %v107
    %2246 = vmatprep.subr.mxu0 0.0
    %2247 = vmatpush1.msra.mxu0 %v108
    %2248 = vmatprep.subr.mxu0 0.0
    %2249 = vmatpush1.msra.mxu0 %v109
    %2250 = vmatprep.subr.mxu0 0.0
    %2251 = vmatpush1.msra.mxu0 %v110
    %2252 = vmatprep.subr.mxu0 0.0
    %2253 = vmatpush1.msra.mxu0 %v111
    %2254 = vmatprep.subr.mxu0 0.0
    %2255 = vmatpush1.msra.mxu0 %v112
    %2256 = vmatprep.subr.mxu0 0.0
    %2257 = vmatpush1.msra.mxu0 0.0
    %2258 = vmatprep.subr.mxu0 0.0
    %2259 = vmatpush1.msra.mxu0 0.0
    %2260 = vmatprep.subr.mxu0 0.0
    %2261 = vmatpush1.msra.mxu0 0.0
    %2262 = vmatprep.subr.mxu0 0.0
    %2263 = vmatpush1.msra.mxu0 0.0
    %2264 = vmatprep.subr.mxu0 0.0
    %2265 = vmatpush1.msra.mxu0 0.0
    %2266 = vmatprep.subr.mxu0 0.0
    %2267 = vmatpush1.msra.mxu0 0.0
    %2268 = vmatprep.subr.mxu0 0.0
    %2269 = vmatpush1.msra.mxu0 0.0
    %2270 = vmatprep.subr.mxu0 0.0
    %2271 = vmatpush1.msra.mxu0 0.0
    %2272 = vmatprep.subr.mxu0 0.0
    %2273 = vmatpush1.msra.mxu0 0.0
    %2274 = vmatprep.subr.mxu0 0.0
    %2275 = vmatpush1.msra.mxu0 0.0
    %2276 = vmatprep.subr.mxu0 0.0
    %2277 = vmatpush1.msra.mxu0 0.0
    %2278 = vmatprep.subr.mxu0 0.0
    %2279 = vmatpush1.msra.mxu0 0.0
    %2280 = vmatprep.subr.mxu0 0.0
    %2281 = vmatpush1.msra.mxu0 0.0
    %2282 = vmatprep.subr.mxu0 0.0
    %2283 = vmatpush1.msra.mxu0 0.0
    %2284 = vmatprep.subr.mxu0 0.0
    %2285 = vmatpush1.msra.mxu0 0.0
    %2286 = vmatprep.subr.mxu0 0.0
    %2287 = vmatpush1.msra.mxu0 0.0
    %2288 = vmatprep.subr.mxu0 0.0
    %2289 = vmatpush1.msra.mxu0 0.0
    %2290 = vmatprep.subr.mxu0 0.0
    %2291 = vmatpush1.msra.mxu0 0.0
    %2292 = vmatprep.subr.mxu0 0.0
    %2293 = vmatpush1.msra.mxu0 0.0
    %2294 = vmatprep.subr.mxu0 0.0
    %2295 = vmatpush1.msra.mxu0 0.0
    %2296 = vmatprep.subr.mxu0 0.0
    %2297 = vmatpush1.msra.mxu0 0.0
    %2298 = vmatprep.subr.mxu0 0.0
    %2299 = vmatpush1.msra.mxu0 0.0
    %2300 = vmatprep.subr.mxu0 0.0
    %2301 = vmatpush1.msra.mxu0 0.0
    %2302 = vmatprep.subr.mxu0 0.0
    %2303 = vmatpush1.msra.mxu0 0.0
    %2304 = vmatprep.mubr.f32.mxu0 0.0
    %2305 = vmatmul.mubr.f32.gmra.mrb[0].mxu0 %v2238
    %v2306 = vpop.f32.mrb[0].mxu0
    %v2307 = vadd.f32 %v317, %v2306
    %v2308 = vpop.f32.mrb[0].mxu0
    %2309 = vdwg.mxu0
    %v2310 = vxor.u32 %v2307, 2147483648
    %v2311 = vmul.f32 %v2310, 1.442695
    %v2312 = vpow.pop %v2311
    %v2313 = vadd.f32 %v2312, 1.0
    %v2314 = vrcp.pop %v2313
    %v2315 = vmul.f32 1.0, %v2314
    %v2316 = vtanh.pop %v2307
    %v2317 = vmul.f32 %v2315, %v2001
    %2319 = vrot.lane.b32.xlu0 %v2316, 64
    %v2320 = vpop.permute.xlu0 %2319
    %v2322 = vmul.f32 %v2315, %v2320
    %2324 = vrot.lane.b32.xlu0 %v2322, 32
    %v2325 = vpop.permute.xlu0 %2324
    %v2327 = vadd.f32 %v2317, %v2325
    %v2328 = vtanh.pop %v2327
    %2330 = vrot.lane.b32.xlu0 %v2328, 64
    %v2331 = vpop.permute.xlu0 %2330
    %v2333 = vmul.f32 %v2315, %v2331
    %v2334 = vrot.slane %v2206, 6
    %v2335 = vrot.slane %v2207, 5
    %v2336 = vsel %vm301, %v2335, %v2334
    %v2337 = vrot.slane %v2208, 4
    %v2338 = vsel %vm304, %v2337, %v2336
    %v2339 = vrot.slane %v2209, 3
    %v2340 = vsel %vm307, %v2339, %v2338
    %2341 = vrot.lane.b32.xlu0 %v2340, 32
    %v2342 = vpop.permute.xlu0 %2341
    %v2343 = vsel %vm114, %v2342, 0
    %2345 = vmatprep.subr.mxu0 0.0
    %2346 = vmatpush1.msra.mxu0 %v101
    %2347 = vmatprep.subr.mxu0 0.0
    %2348 = vmatpush1.msra.mxu0 %v102
    %2349 = vmatprep.subr.mxu0 0.0
    %2350 = vmatpush1.msra.mxu0 %v103
    %2351 = vmatprep.subr.mxu0 0.0
    %2352 = vmatpush1.msra.mxu0 %v104
    %2353 = vmatprep.subr.mxu0 0.0
    %2354 = vmatpush1.msra.mxu0 0.0
    %2355 = vmatprep.subr.mxu0 0.0
    %2356 = vmatpush1.msra.mxu0 0.0
    %2357 = vmatprep.subr.mxu0 0.0
    %2358 = vmatpush1.msra.mxu0 0.0
    %2359 = vmatprep.subr.mxu0 0.0
    %2360 = vmatpush1.msra.mxu0 0.0
    %2361 = vmatprep.subr.mxu0 0.0
    %2362 = vmatpush1.msra.mxu0 0.0
    %2363 = vmatprep.subr.mxu0 0.0
    %2364 = vmatpush1.msra.mxu0 0.0
    %2365 = vmatprep.subr.mxu0 0.0
    %2366 = vmatpush1.msra.mxu0 0.0
    %2367 = vmatprep.subr.mxu0 0.0
    %2368 = vmatpush1.msra.mxu0 0.0
    %2369 = vmatprep.subr.mxu0 0.0
    %2370 = vmatpush1.msra.mxu0 0.0
    %2371 = vmatprep.subr.mxu0 0.0
    %2372 = vmatpush1.msra.mxu0 0.0
    %2373 = vmatprep.subr.mxu0 0.0
    %2374 = vmatpush1.msra.mxu0 0.0
    %2375 = vmatprep.subr.mxu0 0.0
    %2376 = vmatpush1.msra.mxu0 0.0
    %2377 = vmatprep.subr.mxu0 0.0
    %2378 = vmatpush1.msra.mxu0 0.0
    %2379 = vmatprep.subr.mxu0 0.0
    %2380 = vmatpush1.msra.mxu0 0.0
    %2381 = vmatprep.subr.mxu0 0.0
    %2382 = vmatpush1.msra.mxu0 0.0
    %2383 = vmatprep.subr.mxu0 0.0
    %2384 = vmatpush1.msra.mxu0 0.0
    %2385 = vmatprep.subr.mxu0 0.0
    %2386 = vmatpush1.msra.mxu0 0.0
    %2387 = vmatprep.subr.mxu0 0.0
    %2388 = vmatpush1.msra.mxu0 0.0
    %2389 = vmatprep.subr.mxu0 0.0
    %2390 = vmatpush1.msra.mxu0 0.0
    %2391 = vmatprep.subr.mxu0 0.0
    %2392 = vmatpush1.msra.mxu0 0.0
    %2393 = vmatprep.subr.mxu0 0.0
    %2394 = vmatpush1.msra.mxu0 0.0
    %2395 = vmatprep.subr.mxu0 0.0
    %2396 = vmatpush1.msra.mxu0 0.0
    %2397 = vmatprep.subr.mxu0 0.0
    %2398 = vmatpush1.msra.mxu0 0.0
    %2399 = vmatprep.subr.mxu0 0.0
    %2400 = vmatpush1.msra.mxu0 0.0
    %2401 = vmatprep.subr.mxu0 0.0
    %2402 = vmatpush1.msra.mxu0 0.0
    %2403 = vmatprep.subr.mxu0 0.0
    %2404 = vmatpush1.msra.mxu0 0.0
    %2405 = vmatprep.subr.mxu0 0.0
    %2406 = vmatpush1.msra.mxu0 0.0
    %2407 = vmatprep.subr.mxu0 0.0
    %2408 = vmatpush1.msra.mxu0 0.0
    %2409 = vmatprep.mubr.f32.mxu0 0.0
    %2410 = vmatmul.mubr.f32.gmra.mrb[0].mxu0 %v2343
    %v2411 = vpop.f32.mrb[0].mxu0
    %v2412 = vadd.f32 0.0, %v2411
    %v2413 = vpop.f32.mrb[0].mxu0
    %2414 = vdwg.mxu0
    %v2416 = vrot.slane %v2412, 1
    %v2417 = vrot.slane %v2412, 2
    %v2418 = vrot.slane %v2412, 3
    %v2419 = vrot.slane %v2412, 4
    %v2424 = vadd.f32 %v97, %v2416
    %v2425 = vadd.f32 %v98, %v2417
    %v2426 = vadd.f32 %v99, %v2418
    %v2427 = vadd.f32 %v100, %v2419
    %v2428 = vxor.u32 %v2424, 2147483648
    %v2429 = vxor.u32 %v2425, 2147483648
    %v2430 = vxor.u32 %v2426, 2147483648
    %v2431 = vxor.u32 %v2427, 2147483648
    %v2432 = vmul.f32 %v2428, 1.442695
    %v2433 = vpow.pop %v2432
    %v2434 = vmul.f32 %v2429, 1.442695
    %v2435 = vpow.pop %v2434
    %v2436 = vmul.f32 %v2430, 1.442695
    %v2437 = vpow.pop %v2436
    %v2438 = vmul.f32 %v2431, 1.442695
    %v2439 = vpow.pop %v2438
    %v2440 = vadd.f32 %v2433, 1.0
    %v2441 = vadd.f32 %v2435, 1.0
    %v2442 = vadd.f32 %v2437, 1.0
    %v2443 = vadd.f32 %v2439, 1.0
    %v2444 = vrcp.pop %v2440
    %v2445 = vmul.f32 1.0, %v2444
    %v2446 = vrcp.pop %v2441
    %v2447 = vmul.f32 1.0, %v2446
    %v2448 = vrcp.pop %v2442
    %v2449 = vmul.f32 1.0, %v2448
    %v2450 = vrcp.pop %v2443
    %v2451 = vmul.f32 1.0, %v2450
    %v2452 = vtanh.pop %v2424
    %v2453 = vtanh.pop %v2425
    %v2454 = vtanh.pop %v2426
    %v2455 = vtanh.pop %v2427
    %v2460 = vrot.slane %v2182, 7
    %v2461 = vrot.slane %v2183, 7
    %v2462 = vrot.slane %v2184, 7
    %v2463 = vrot.slane %v2185, 7
    %v2468 = vmul.f32 %v2445, %v2460
    %v2469 = vmul.f32 %v2447, %v2461
    %v2470 = vmul.f32 %v2449, %v2462
    %v2471 = vmul.f32 %v2451, %v2463
    %2476 = vrot.lane.b32.xlu0 %v2452, 64
    %v2477 = vpop.permute.xlu0 %2476
    %2478 = vrot.lane.b32.xlu0 %v2453, 64
    %v2479 = vpop.permute.xlu0 %2478
    %2480 = vrot.lane.b32.xlu0 %v2454, 64
    %v2481 = vpop.permute.xlu0 %2480
    %2482 = vrot.lane.b32.xlu0 %v2455, 64
    %v2483 = vpop.permute.xlu0 %2482
    %v2488 = vmul.f32 %v2445, %v2477
    %v2489 = vmul.f32 %v2447, %v2479
    %v2490 = vmul.f32 %v2449, %v2481
    %v2491 = vmul.f32 %v2451, %v2483
    %2496 = vrot.lane.b32.xlu0 %v2488, 32
    %v2497 = vpop.permute.xlu0 %2496
    %2498 = vrot.lane.b32.xlu0 %v2489, 32
    %v2499 = vpop.permute.xlu0 %2498
    %2500 = vrot.lane.b32.xlu0 %v2490, 32
    %v2501 = vpop.permute.xlu0 %2500
    %2502 = vrot.lane.b32.xlu0 %v2491, 32
    %v2503 = vpop.permute.xlu0 %2502
    %v2508 = vadd.f32 %v2468, %v2497
    %v2509 = vadd.f32 %v2469, %v2499
    %v2510 = vadd.f32 %v2470, %v2501
    %v2511 = vadd.f32 %v2471, %v2503
    %v2512 = vtanh.pop %v2508
    %v2513 = vtanh.pop %v2509
    %v2514 = vtanh.pop %v2510
    %v2515 = vtanh.pop %v2511
    %2520 = vrot.lane.b32.xlu0 %v2512, 64
    %v2521 = vpop.permute.xlu0 %2520
    %2522 = vrot.lane.b32.xlu0 %v2513, 64
    %v2523 = vpop.permute.xlu0 %2522
    %2524 = vrot.lane.b32.xlu0 %v2514, 64
    %v2525 = vpop.permute.xlu0 %2524
    %2526 = vrot.lane.b32.xlu0 %v2515, 64
    %v2527 = vpop.permute.xlu0 %2526
    %v2532 = vmul.f32 %v2445, %v2521
    %v2533 = vmul.f32 %v2447, %v2523
    %v2534 = vmul.f32 %v2449, %v2525
    %v2535 = vmul.f32 %v2451, %v2527
    %v2540 = vrot.slane %v2533, 7
    %v2541 = vrot.slane %v2534, 6
    %v2542 = vsel %vm301, %v2541, %v2540
    %v2543 = vrot.slane %v2535, 5
    %v2544 = vsel %vm304, %v2543, %v2542
    %2545 = vrot.lane.b32.xlu0 %v2532, 32
    %v2546 = vpop.permute.xlu0 %2545
    %2547 = vrot.lane.b32.xlu0 %v2544, 32
    %v2548 = vpop.permute.xlu0 %2547
    %v2552 = vrot.slane %v2333, 1
    %2553 = vrot.lane.b32.xlu0 %v2552, 64
    %v2554 = vpop.permute.xlu0 %2553
    %v2556 = vsel %vm114, %v2546, %v2554
    %v2557 = vsel %vm114, %v2548, %v2554
    %vm2560 = vcmask 1040384
    %v2561 = vrot.slane %v2556, 7
    %v2562 = vrot.slane %v2557, 7
    %v2563 = vsel %vm2560, %v2561, %v2562
    %v2564 = vsel %vm319, %v2563, 0
    %2566 = vmatprep.subr.mxu0 0.0
    %2567 = vmatpush1.msra.mxu0 %v105
    %2568 = vmatprep.subr.mxu0 0.0
    %2569 = vmatpush1.msra.mxu0 %v106
    %2570 = vmatprep.subr.mxu0 0.0
    %2571 = vmatpush1.msra.mxu0 %v107
    %2572 = vmatprep.subr.mxu0 0.0
    %2573 = vmatpush1.msra.mxu0 %v108
    %2574 = vmatprep.subr.mxu0 0.0
    %2575 = vmatpush1.msra.mxu0 %v109
    %2576 = vmatprep.subr.mxu0 0.0
    %2577 = vmatpush1.msra.mxu0 %v110
    %2578 = vmatprep.subr.mxu0 0.0
    %2579 = vmatpush1.msra.mxu0 %v111
    %2580 = vmatprep.subr.mxu0 0.0
    %2581 = vmatpush1.msra.mxu0 %v112
    %2582 = vmatprep.subr.mxu0 0.0
    %2583 = vmatpush1.msra.mxu0 0.0
    %2584 = vmatprep.subr.mxu0 0.0
    %2585 = vmatpush1.msra.mxu0 0.0
    %2586 = vmatprep.subr.mxu0 0.0
    %2587 = vmatpush1.msra.mxu0 0.0
    %2588 = vmatprep.subr.mxu0 0.0
    %2589 = vmatpush1.msra.mxu0 0.0
    %2590 = vmatprep.subr.mxu0 0.0
    %2591 = vmatpush1.msra.mxu0 0.0
    %2592 = vmatprep.subr.mxu0 0.0
    %2593 = vmatpush1.msra.mxu0 0.0
    %2594 = vmatprep.subr.mxu0 0.0
    %2595 = vmatpush1.msra.mxu0 0.0
    %2596 = vmatprep.subr.mxu0 0.0
    %2597 = vmatpush1.msra.mxu0 0.0
    %2598 = vmatprep.subr.mxu0 0.0
    %2599 = vmatpush1.msra.mxu0 0.0
    %2600 = vmatprep.subr.mxu0 0.0
    %2601 = vmatpush1.msra.mxu0 0.0
    %2602 = vmatprep.subr.mxu0 0.0
    %2603 = vmatpush1.msra.mxu0 0.0
    %2604 = vmatprep.subr.mxu0 0.0
    %2605 = vmatpush1.msra.mxu0 0.0
    %2606 = vmatprep.subr.mxu0 0.0
    %2607 = vmatpush1.msra.mxu0 0.0
    %2608 = vmatprep.subr.mxu0 0.0
    %2609 = vmatpush1.msra.mxu0 0.0
    %2610 = vmatprep.subr.mxu0 0.0
    %2611 = vmatpush1.msra.mxu0 0.0
    %2612 = vmatprep.subr.mxu0 0.0
    %2613 = vmatpush1.msra.mxu0 0.0
    %2614 = vmatprep.subr.mxu0 0.0
    %2615 = vmatpush1.msra.mxu0 0.0
    %2616 = vmatprep.subr.mxu0 0.0
    %2617 = vmatpush1.msra.mxu0 0.0
    %2618 = vmatprep.subr.mxu0 0.0
    %2619 = vmatpush1.msra.mxu0 0.0
    %2620 = vmatprep.subr.mxu0 0.0
    %2621 = vmatpush1.msra.mxu0 0.0
    %2622 = vmatprep.subr.mxu0 0.0
    %2623 = vmatpush1.msra.mxu0 0.0
    %2624 = vmatprep.subr.mxu0 0.0
    %2625 = vmatpush1.msra.mxu0 0.0
    %2626 = vmatprep.subr.mxu0 0.0
    %2627 = vmatpush1.msra.mxu0 0.0
    %2628 = vmatprep.subr.mxu0 0.0
    %2629 = vmatpush1.msra.mxu0 0.0
    %2630 = vmatprep.mubr.f32.mxu0 0.0
    %2631 = vmatmul.mubr.f32.gmra.mrb[0].mxu0 %v2564
    %v2632 = vpop.f32.mrb[0].mxu0
    %v2633 = vadd.f32 %v317, %v2632
    %v2634 = vpop.f32.mrb[0].mxu0
    %2635 = vdwg.mxu0
    %v2636 = vxor.u32 %v2633, 2147483648
    %v2637 = vmul.f32 %v2636, 1.442695
    %v2638 = vpow.pop %v2637
    %v2639 = vadd.f32 %v2638, 1.0
    %v2640 = vrcp.pop %v2639
    %v2641 = vmul.f32 1.0, %v2640
    %v2642 = vtanh.pop %v2633
    %v2643 = vmul.f32 %v2641, %v2327
    %2645 = vrot.lane.b32.xlu0 %v2642, 64
    %v2646 = vpop.permute.xlu0 %2645
    %v2648 = vmul.f32 %v2641, %v2646
    %2650 = vrot.lane.b32.xlu0 %v2648, 32
    %v2651 = vpop.permute.xlu0 %2650
    %v2653 = vadd.f32 %v2643, %v2651
    %v2654 = vtanh.pop %v2653
    %2656 = vrot.lane.b32.xlu0 %v2654, 64
    %v2657 = vpop.permute.xlu0 %2656
    %v2659 = vmul.f32 %v2641, %v2657
    %v2660 = vld [vmem:[%s6] sm:$0xff]
    %v2661 = vld [vmem:[%s6 + $0x8] sm:$0xff]
    %v2662 = vld [vmem:[%s6 + $0x10] sm:$0xff]
    %v2663 = vld [vmem:[%s6 + $0x18] sm:$0xff]
    %v2664 = vld [vmem:[#allocation2] sm:$0x1]
    %v2666 = vlaneseq
    %v2667 = vshrl.u32 %v2666, 7
    %v2668 = vsub.s32 0, %v2667
    %v2669 = vrot.slane %v2664, %v2668
    %2672 = vrot.lane.b32.xlu0 %v2659, 32
    %v2673 = vpop.permute.xlu0 %2672
    %v2674 = vsel %vm114, %v2673, 0
    %2676 = vmatprep.subr.mxu0 0.0
    %2677 = vmatpush1.msra.mxu0 %v2660
    %2678 = vmatprep.subr.mxu0 0.0
    %2679 = vmatpush1.msra.mxu0 %v2661
    %2680 = vmatprep.subr.mxu0 0.0
    %2681 = vmatpush1.msra.mxu0 %v2662
    %2682 = vmatprep.subr.mxu0 0.0
    %2683 = vmatpush1.msra.mxu0 %v2663
    %2684 = vmatprep.subr.mxu0 0.0
    %2685 = vmatpush1.msra.mxu0 0.0
    %2686 = vmatprep.subr.mxu0 0.0
    %2687 = vmatpush1.msra.mxu0 0.0
    %2688 = vmatprep.subr.mxu0 0.0
    %2689 = vmatpush1.msra.mxu0 0.0
    %2690 = vmatprep.subr.mxu0 0.0
    %2691 = vmatpush1.msra.mxu0 0.0
    %2692 = vmatprep.subr.mxu0 0.0
    %2693 = vmatpush1.msra.mxu0 0.0
    %2694 = vmatprep.subr.mxu0 0.0
    %2695 = vmatpush1.msra.mxu0 0.0
    %2696 = vmatprep.subr.mxu0 0.0
    %2697 = vmatpush1.msra.mxu0 0.0
    %2698 = vmatprep.subr.mxu0 0.0
    %2699 = vmatpush1.msra.mxu0 0.0
    %2700 = vmatprep.subr.mxu0 0.0
    %2701 = vmatpush1.msra.mxu0 0.0
    %2702 = vmatprep.subr.mxu0 0.0
    %2703 = vmatpush1.msra.mxu0 0.0
    %2704 = vmatprep.subr.mxu0 0.0
    %2705 = vmatpush1.msra.mxu0 0.0
    %2706 = vmatprep.subr.mxu0 0.0
    %2707 = vmatpush1.msra.mxu0 0.0
    %2708 = vmatprep.subr.mxu0 0.0
    %2709 = vmatpush1.msra.mxu0 0.0
    %2710 = vmatprep.subr.mxu0 0.0
    %2711 = vmatpush1.msra.mxu0 0.0
    %2712 = vmatprep.subr.mxu0 0.0
    %2713 = vmatpush1.msra.mxu0 0.0
    %2714 = vmatprep.subr.mxu0 0.0
    %2715 = vmatpush1.msra.mxu0 0.0
    %2716 = vmatprep.subr.mxu0 0.0
    %2717 = vmatpush1.msra.mxu0 0.0
    %2718 = vmatprep.subr.mxu0 0.0
    %2719 = vmatpush1.msra.mxu0 0.0
    %2720 = vmatprep.subr.mxu0 0.0
    %2721 = vmatpush1.msra.mxu0 0.0
    %2722 = vmatprep.subr.mxu0 0.0
    %2723 = vmatpush1.msra.mxu0 0.0
    %2724 = vmatprep.subr.mxu0 0.0
    %2725 = vmatpush1.msra.mxu0 0.0
    %2726 = vmatprep.subr.mxu0 0.0
    %2727 = vmatpush1.msra.mxu0 0.0
    %2728 = vmatprep.subr.mxu0 0.0
    %2729 = vmatpush1.msra.mxu0 0.0
    %2730 = vmatprep.subr.mxu0 0.0
    %2731 = vmatpush1.msra.mxu0 0.0
    %2732 = vmatprep.subr.mxu0 0.0
    %2733 = vmatpush1.msra.mxu0 0.0
    %2734 = vmatprep.subr.mxu0 0.0
    %2735 = vmatpush1.msra.mxu0 0.0
    %2736 = vmatprep.subr.mxu0 0.0
    %2737 = vmatpush1.msra.mxu0 0.0
    %2738 = vmatprep.subr.mxu0 0.0
    %2739 = vmatpush1.msra.mxu0 0.0
    %2740 = vmatprep.mubr.f32.mxu0 0.0
    %2741 = vmatmul.mubr.f32.gmra.mrb[0].mxu0 %v2674
    %v2742 = vpop.f32.mrb[0].mxu0
    %v2743 = vadd.f32 %v2669, %v2742
    %v2744 = vpop.f32.mrb[0].mxu0
    %2745 = vdwg.mxu0
    %vm2746 = vcmask 3072
    %2747 = vst.msk [vmem:[%s8] sm:$0xf] %vm2746, %v2743
    // Predicated region
    $region42: #{lstm_model_forward.1} parent=1 // pred_check
      _
    $region43: #{lstm_model_forward.1} parent=1 // pred_check_branch
      %2749 = sbr.rel (0) target = $region45
    $region44: #{lstm_model_forward.1} parent=1 // pred_region
      _
    $region45: #{lstm_model_forward.1} parent=1 // pred_fallthru
      _
    // Predicated region
    $region46: #{lstm_model_forward.1} parent=1 // pred_check
      _
    $region47: #{lstm_model_forward.1} parent=1 // pred_check_branch
      %2751 = sbr.rel (0) target = $region49
    $region48: #{lstm_model_forward.1} parent=1 // pred_region
      _
    $region49: #{lstm_model_forward.1} parent=1 // pred_fallthru
      _
    %2752 = vsyncpa [#allocation4], 1
    %2753 = vsyncpa [#allocation6], 1

</llo_original>
